<compile_context>
chip_gen: v6e
topology: v6e:2x2x1
jax: 0.10.0
libtpu: 0.0.40
codegen_flags: <defaults>
</compile_context>

<pallas_src>
import functools

import jax
import jax.numpy as jnp
import numpy as np
from jax.experimental import pallas as pl
from jax.experimental.pallas import tpu as pltpu

N_EMBD = 128
N_HEAD = 4
HEAD_DIM = N_EMBD // N_HEAD
EPS = 1e-5

# MXU operand dtype (f32 accumulation is always kept via
# preferred_element_type).  bf16 is the high-throughput path on all of
# v5e/v6e/v7x; the correctness test tolerance is loosened to 2e-2 accordingly.
MATMUL_DTYPE = jnp.bfloat16


def _mm(a, b):
    """a @ b on the MXU with f32 accumulation (operands already MATMUL_DTYPE)."""
    return jax.lax.dot_general(
        a, b,
        dimension_numbers=(((a.ndim - 1,), (0,)), ((), ())),
        preferred_element_type=jnp.float32)


def _layernorm(h, w, b):
    mu = jnp.mean(h, axis=-1, keepdims=True)
    var = jnp.mean((h - mu) ** 2, axis=-1, keepdims=True)
    return (h - mu) * jax.lax.rsqrt(var + EPS) * w + b


def _gelu_exact(x):
    # exact (erf-based) GELU, matching torch.nn.GELU() default
    return 0.5 * x * (1.0 + jax.lax.erf(x * np.float32(1.0 / np.sqrt(2.0))))


def block_kernel(x_ref, mask_ref,
                 ln1_w_ref, ln1_b_ref,
                 w_attn_ref, b_attn_ref,
                 w_proj_ref, b_proj_ref,
                 ln2_w_ref, ln2_b_ref,
                 w_fc_ref, b_fc_ref,
                 w_fc2_ref, b_fc2_ref,
                 o_ref,
                 y_scratch):
    x = x_ref[...].astype(jnp.float32)             # (RB, C) folded rows
    neg_mask = mask_ref[...]                       # (RB, RB) additive mask (0 / -1e30)

    # ---------------- attention branch: x + attn(ln_1(x)) -------------------
    h = _layernorm(x, ln1_w_ref[...], ln1_b_ref[...])
    qkv = _mm(h.astype(MATMUL_DTYPE), w_attn_ref[...]) + b_attn_ref[...]   # (RB, 3C) f32
    qkv_b = qkv.astype(MATMUL_DTYPE)               # single hoisted cast for all heads

    scale = np.float32(1.0 / np.sqrt(HEAD_DIM))
    for hh in range(N_HEAD):                       # static unroll over 4 heads
        lo = hh * HEAD_DIM
        qh = qkv_b[:, 0 * N_EMBD + lo: 0 * N_EMBD + lo + HEAD_DIM]
        kh = qkv_b[:, 1 * N_EMBD + lo: 1 * N_EMBD + lo + HEAD_DIM]
        vh = qkv_b[:, 2 * N_EMBD + lo: 2 * N_EMBD + lo + HEAD_DIM]
        # scores: contract last dims directly on the MXU (no kh.T transpose)
        att = jax.lax.dot_general(
            qh, kh,
            dimension_numbers=(((1,), (1,)), ((), ())),
            preferred_element_type=jnp.float32) * scale
        att = att + neg_mask
        att = att - jnp.max(att, axis=-1, keepdims=True)
        p = jnp.exp(att)
        p = p * pl.reciprocal(jnp.sum(p, axis=-1, keepdims=True), approx=True)
        head_out = _mm(p.astype(MATMUL_DTYPE), vh)                 # (RB, HEAD_DIM) f32
        # masked lane store into this head's 32-lane slice of the scratch
        y_scratch[:, lo:lo + HEAD_DIM] = head_out
    # ONE full-depth (RB,128)@(128,128) c_proj matmul instead of 4 K=32 ones
    y_proj = _mm(y_scratch[...].astype(MATMUL_DTYPE), w_proj_ref[...]) + b_proj_ref[...]
    x1 = x + y_proj                                # resid_dropout = identity

    # ---------------- MLP branch: x + mlp(ln_2(x)) ---------------------------
    h2 = _layernorm(x1, ln2_w_ref[...], ln2_b_ref[...])
    f = _gelu_exact(_mm(h2.astype(MATMUL_DTYPE), w_fc_ref[...]) + b_fc_ref[...])
    m = _mm(f.astype(MATMUL_DTYPE), w_fc2_ref[...]) + b_fc2_ref[...]
    o_ref[...] = (x1 + m).astype(o_ref.dtype)      # mlp dropout = identity


def _choose_group(B, T, rb_cap=256):
    """Pick G = batches folded per row block.

    Constraints: G divides B, RB = G*T is a multiple of 8 (sublane tiling rule)
    and RB <= rb_cap (v6e/v7x MXU depth).  Prefer the largest such G that still
    leaves >= 2 grid steps so a "parallel" grid can shard across v7x's two
    TensorCores (single-TC v5e/v6e lose nothing: weights stay VMEM-resident via
    constant index maps and total activation DMA bytes are unchanged).
    """
    divisors = [g for g in range(1, B + 1) if B % g == 0]
    ok = [g for g in divisors if (g * T) % 8 == 0 and g * T <= rb_cap]
    if not ok:
        # fall back: full-extent block (block_shape == array shape is allowed)
        ok = [g for g in divisors if (g * T) % 8 == 0] or [B]
    multi = [g for g in ok if B // g >= 2]
    return max(multi) if multi else max(ok)


def transformer_block(x, params, *, row_block_batches=None):
    B, T, C = x.shape
    G = _choose_group(B, T) if row_block_batches is None else row_block_batches
    assert B % G == 0
    RB = G * T                                     # rows per grid step
    n_blocks = B // G

    x2 = x.reshape(B * T, C)                       # fold batch into the MXU M dim

    # static block-diagonal causal mask, built once on the host
    row = np.arange(RB)[:, None]
    col = np.arange(RB)[None, :]
    allowed = (col <= row) & ((row // T) == (col // T))
    neg_mask = jnp.asarray(np.where(allowed, 0.0, -1e30), jnp.float32)

    # cast matmul weights to bf16 once on the host/XLA side (halves weight DMA,
    # removes per-step in-kernel casts); LN params & biases stay f32.
    (ln1_w, ln1_b, w_attn, b_attn, w_proj, b_proj,
     ln2_w, ln2_b, w_fc, b_fc, w_fc2, b_fc2) = params
    w_attn = w_attn.astype(MATMUL_DTYPE)
    w_proj = w_proj.astype(MATMUL_DTYPE)
    w_fc = w_fc.astype(MATMUL_DTYPE)
    w_fc2 = w_fc2.astype(MATMUL_DTYPE)

    def const2(shp):
        # constant index map -> stays VMEM-resident across grid steps
        return pl.BlockSpec(shp, lambda i: (0, 0))

    in_specs = [
        pl.BlockSpec((RB, C), lambda i: (i, 0)),   # activations (streamed)
        const2((RB, RB)),                          # additive causal mask
        const2((1, C)), const2((1, C)),            # ln_1 weight / bias
        const2((C, 3 * C)), const2((1, 3 * C)),    # c_attn
        const2((C, C)), const2((1, C)),            # attn c_proj
        const2((1, C)), const2((1, C)),            # ln_2 weight / bias
        const2((C, 4 * C)), const2((1, 4 * C)),    # mlp c_fc
        const2((4 * C, C)), const2((1, C)),        # mlp c_proj
    ]
    out = pl.pallas_call(
        block_kernel,
        out_shape=jax.ShapeDtypeStruct((B * T, C), x.dtype),
        grid_spec=pltpu.PrefetchScalarGridSpec(
            num_scalar_prefetch=0,
            grid=(n_blocks,),
            in_specs=in_specs,
            out_specs=pl.BlockSpec((RB, C), lambda i: (i, 0)),
            scratch_shapes=[pltpu.VMEM((RB, N_EMBD), jnp.float32)],
        ),
        compiler_params=pltpu.CompilerParams(dimension_semantics=("parallel",)),
    )(x2, neg_mask,
      ln1_w, ln1_b, w_attn, b_attn, w_proj, b_proj,
      ln2_w, ln2_b, w_fc, b_fc, w_fc2, b_fc2)
    return out.reshape(B, T, C)


def block_reference(x, params):
    (ln1_w, ln1_b, w_attn, b_attn, w_proj, b_proj,
     ln2_w, ln2_b, w_fc, b_fc, w_fc2, b_fc2) = params

    def ln(h, w, b):
        mu = h.mean(-1, keepdims=True)
        var = ((h - mu) ** 2).mean(-1, keepdims=True)
        return (h - mu) / jnp.sqrt(var + EPS) * w + b

    B, T, C = x.shape
    h = ln(x, ln1_w, ln1_b)
    qkv = h @ w_attn + b_attn
    q, k, v = jnp.split(qkv, 3, axis=-1)
    heads = lambda t: t.reshape(B, T, N_HEAD, HEAD_DIM).transpose(0, 2, 1, 3)
    q, k, v = heads(q), heads(k), heads(v)
    att = jnp.einsum('bhqd,bhkd->bhqk', q, k) * (1.0 / np.sqrt(HEAD_DIM))
    mask = jnp.tril(jnp.ones((T, T), bool))
    att = jnp.where(mask, att, -jnp.inf)
    att = jax.nn.softmax(att, axis=-1)
    y = jnp.einsum('bhqk,bhkd->bhqd', att, v).transpose(0, 2, 1, 3).reshape(B, T, C)
    x1 = x + (y @ w_proj + b_proj)
    h2 = ln(x1, ln2_w, ln2_b)
    f = h2 @ w_fc + b_fc
    f = 0.5 * f * (1.0 + jax.lax.erf(f / np.sqrt(2.0)))
    return x1 + (f @ w_fc2 + b_fc2)


def init_params(key):
    C = N_EMBD
    ks = jax.random.split(key, 8)
    std = 0.02
    ln1_w = jnp.ones((1, C), jnp.float32)
    ln1_b = jnp.zeros((1, C), jnp.float32)
    ln2_w = jnp.ones((1, C), jnp.float32)
    ln2_b = jnp.zeros((1, C), jnp.float32)
    w_attn = std * jax.random.normal(ks[0], (C, 3 * C), jnp.float32)
    b_attn = std * jax.random.normal(ks[1], (1, 3 * C), jnp.float32)
    w_proj = std * jax.random.normal(ks[2], (C, C), jnp.float32)
    b_proj = std * jax.random.normal(ks[3], (1, C), jnp.float32)
    w_fc = std * jax.random.normal(ks[4], (C, 4 * C), jnp.float32)
    b_fc = std * jax.random.normal(ks[5], (1, 4 * C), jnp.float32)
    w_fc2 = std * jax.random.normal(ks[6], (4 * C, C), jnp.float32)
    b_fc2 = std * jax.random.normal(ks[7], (1, C), jnp.float32)
    return (ln1_w, ln1_b, w_attn, b_attn, w_proj, b_proj,
            ln2_w, ln2_b, w_fc, b_fc, w_fc2, b_fc2)


if __name__ == "__main__":
    key = jax.random.PRNGKey(0)
    k_x, k_p = jax.random.split(key)
    B, T, C = 2, 8, N_EMBD
    x = jax.random.normal(k_x, (B, T, C), jnp.float32)
    params = init_params(k_p)

    out = transformer_block(x, params)
    out = jax.block_until_ready(out)

    ref = jax.block_until_ready(block_reference(x, params))
    # bf16 MXU operands + approx reciprocal -> tolerance loosened from 1e-4
    np.testing.assert_allclose(np.asarray(out), np.asarray(ref), atol=2e-2, rtol=2e-2)

    print("KERNEL_OK")
</pallas_src>

<mosaic_0001>
module attributes {stable_mosaic.version = 11 : i64} {
  func.func @block_kernel(%arg0: i32, %arg1: memref<8x128xf32, #tpu.memory_space<vmem>>, %arg2: memref<8x8xf32, #tpu.memory_space<vmem>>, %arg3: memref<1x128xf32, #tpu.memory_space<vmem>>, %arg4: memref<1x128xf32, #tpu.memory_space<vmem>>, %arg5: memref<128x384xbf16, #tpu.memory_space<vmem>>, %arg6: memref<1x384xf32, #tpu.memory_space<vmem>>, %arg7: memref<128x128xbf16, #tpu.memory_space<vmem>>, %arg8: memref<1x128xf32, #tpu.memory_space<vmem>>, %arg9: memref<1x128xf32, #tpu.memory_space<vmem>>, %arg10: memref<1x128xf32, #tpu.memory_space<vmem>>, %arg11: memref<128x512xbf16, #tpu.memory_space<vmem>>, %arg12: memref<1x512xf32, #tpu.memory_space<vmem>>, %arg13: memref<512x128xbf16, #tpu.memory_space<vmem>>, %arg14: memref<1x128xf32, #tpu.memory_space<vmem>>, %arg15: memref<8x128xf32, #tpu.memory_space<vmem>>, %arg16: memref<8x128xf32, #tpu.memory_space<vmem>>) attributes {dimension_semantics = [#tpu.dimension_semantics<parallel>], iteration_bounds = array<i64: 2>, scalar_prefetch = 0 : i64, scratch_operands = 1 : i64, tpu.core_type = #tpu.core_type<tc>, window_params = [{transform_indices = @transform_0, window_bounds = array<i64: 8, 128>}, {pipeline_mode = #tpu.pipeline_mode<synchronous>, transform_indices = @transform_1, window_bounds = array<i64: 8, 8>}, {pipeline_mode = #tpu.pipeline_mode<synchronous>, transform_indices = @transform_2, window_bounds = array<i64: 1, 128>}, {pipeline_mode = #tpu.pipeline_mode<synchronous>, transform_indices = @transform_3, window_bounds = array<i64: 1, 128>}, {pipeline_mode = #tpu.pipeline_mode<synchronous>, transform_indices = @transform_4, window_bounds = array<i64: 128, 384>}, {pipeline_mode = #tpu.pipeline_mode<synchronous>, transform_indices = @transform_5, window_bounds = array<i64: 1, 384>}, {pipeline_mode = #tpu.pipeline_mode<synchronous>, transform_indices = @transform_6, window_bounds = array<i64: 128, 128>}, {pipeline_mode = #tpu.pipeline_mode<synchronous>, transform_indices = @transform_7, window_bounds = array<i64: 1, 128>}, {pipeline_mode = #tpu.pipeline_mode<synchronous>, transform_indices = @transform_8, window_bounds = array<i64: 1, 128>}, {pipeline_mode = #tpu.pipeline_mode<synchronous>, transform_indices = @transform_9, window_bounds = array<i64: 1, 128>}, {pipeline_mode = #tpu.pipeline_mode<synchronous>, transform_indices = @transform_10, window_bounds = array<i64: 128, 512>}, {pipeline_mode = #tpu.pipeline_mode<synchronous>, transform_indices = @transform_11, window_bounds = array<i64: 1, 512>}, {pipeline_mode = #tpu.pipeline_mode<synchronous>, transform_indices = @transform_12, window_bounds = array<i64: 512, 128>}, {pipeline_mode = #tpu.pipeline_mode<synchronous>, transform_indices = @transform_13, window_bounds = array<i64: 1, 128>}, {transform_indices = @transform_14, window_bounds = array<i64: 8, 128>}]} {
    %c0 = arith.constant 0 : index
    %c0_0 = arith.constant 0 : index
    %0 = vector.load %arg1[%c0, %c0_0] : memref<8x128xf32, #tpu.memory_space<vmem>>, vector<8x128xf32>
    %c0_1 = arith.constant 0 : index
    %c0_2 = arith.constant 0 : index
    %1 = vector.load %arg2[%c0_1, %c0_2] : memref<8x8xf32, #tpu.memory_space<vmem>>, vector<8x8xf32>
    %c0_3 = arith.constant 0 : index
    %c0_4 = arith.constant 0 : index
    %2 = vector.load %arg3[%c0_3, %c0_4] : memref<1x128xf32, #tpu.memory_space<vmem>>, vector<1x128xf32>
    %c0_5 = arith.constant 0 : index
    %c0_6 = arith.constant 0 : index
    %3 = vector.load %arg4[%c0_5, %c0_6] : memref<1x128xf32, #tpu.memory_space<vmem>>, vector<1x128xf32>
    %cst = arith.constant dense<0.000000e+00> : vector<8xf32>
    %4 = vector.multi_reduction <add>, %0, %cst [1] : vector<8x128xf32> to vector<8xf32>
    %5 = vector.shape_cast %4 : vector<8xf32> to vector<8x1xf32>
    %cst_7 = arith.constant 1.280000e+02 : f32
    %6 = vector.broadcast %cst_7 : f32 to vector<8x1xf32>
    %7 = arith.divf %5, %6 : vector<8x1xf32>
    %8 = vector.broadcast %7 : vector<8x1xf32> to vector<8x128xf32>
    %9 = arith.subf %0, %8 : vector<8x128xf32>
    %10 = arith.mulf %9, %9 : vector<8x128xf32>
    %cst_8 = arith.constant dense<0.000000e+00> : vector<8xf32>
    %11 = vector.multi_reduction <add>, %10, %cst_8 [1] : vector<8x128xf32> to vector<8xf32>
    %12 = vector.shape_cast %11 : vector<8xf32> to vector<8x1xf32>
    %cst_9 = arith.constant 1.280000e+02 : f32
    %13 = vector.broadcast %cst_9 : f32 to vector<8x1xf32>
    %14 = arith.divf %12, %13 : vector<8x1xf32>
    %15 = vector.broadcast %7 : vector<8x1xf32> to vector<8x128xf32>
    %16 = arith.subf %0, %15 : vector<8x128xf32>
    %cst_10 = arith.constant 9.99999974E-6 : f32
    %17 = vector.broadcast %cst_10 : f32 to vector<8x1xf32>
    %18 = arith.addf %14, %17 : vector<8x1xf32>
    %19 = math.rsqrt %18 : vector<8x1xf32>
    %20 = vector.broadcast %19 : vector<8x1xf32> to vector<8x128xf32>
    %21 = arith.mulf %16, %20 : vector<8x128xf32>
    %22 = vector.broadcast %2 : vector<1x128xf32> to vector<8x128xf32>
    %23 = arith.mulf %21, %22 : vector<8x128xf32>
    %24 = vector.broadcast %3 : vector<1x128xf32> to vector<8x128xf32>
    %25 = arith.addf %23, %24 : vector<8x128xf32>
    %26 = arith.truncf %25 : vector<8x128xf32> to vector<8x128xbf16>
    %c0_11 = arith.constant 0 : index
    %c0_12 = arith.constant 0 : index
    %27 = vector.load %arg5[%c0_11, %c0_12] : memref<128x384xbf16, #tpu.memory_space<vmem>>, vector<128x384xbf16>
    %cst_13 = arith.constant dense<0.000000e+00> : vector<8x384xf32>
    %28 = tpu.matmul %26, %27, %cst_13 {dimension_numbers = #tpu.dot_dimension_numbers<[1], [0], [0], [1], [0, 0, 1, 1], [], []>} : vector<8x128xbf16>, vector<128x384xbf16>, vector<8x384xf32> -> vector<8x384xf32>
    %c0_14 = arith.constant 0 : index
    %c0_15 = arith.constant 0 : index
    %29 = vector.load %arg6[%c0_14, %c0_15] : memref<1x384xf32, #tpu.memory_space<vmem>>, vector<1x384xf32>
    %30 = vector.broadcast %29 : vector<1x384xf32> to vector<8x384xf32>
    %31 = arith.addf %28, %30 : vector<8x384xf32>
    %32 = arith.truncf %31 : vector<8x384xf32> to vector<8x384xbf16>
    %33 = vector.extract_strided_slice %32 {offsets = [0, 0], sizes = [8, 32], strides = [1, 1]} : vector<8x384xbf16> to vector<8x32xbf16>
    %34 = vector.extract_strided_slice %32 {offsets = [0, 128], sizes = [8, 32], strides = [1, 1]} : vector<8x384xbf16> to vector<8x32xbf16>
    %35 = vector.extract_strided_slice %32 {offsets = [0, 256], sizes = [8, 32], strides = [1, 1]} : vector<8x384xbf16> to vector<8x32xbf16>
    %cst_16 = arith.constant dense<0.000000e+00> : vector<8x8xf32>
    %36 = tpu.matmul %33, %34, %cst_16 {dimension_numbers = #tpu.dot_dimension_numbers<[1], [1], [0], [0], [0, 0, 1, 0], [], []>} : vector<8x32xbf16>, vector<8x32xbf16>, vector<8x8xf32> -> vector<8x8xf32>
    %cst_17 = arith.constant 0.176776692 : f32
    %37 = vector.broadcast %cst_17 : f32 to vector<8x8xf32>
    %38 = arith.mulf %36, %37 : vector<8x8xf32>
    %39 = arith.addf %38, %1 : vector<8x8xf32>
    %cst_18 = arith.constant dense<0xFF800000> : vector<8xf32>
    %40 = vector.multi_reduction <maximumf>, %39, %cst_18 [1] : vector<8x8xf32> to vector<8xf32>
    %41 = vector.shape_cast %40 : vector<8xf32> to vector<8x1xf32>
    %42 = vector.broadcast %41 : vector<8x1xf32> to vector<8x8xf32>
    %43 = arith.subf %39, %42 : vector<8x8xf32>
    %44 = math.exp %43 : vector<8x8xf32>
    %cst_19 = arith.constant dense<0.000000e+00> : vector<8xf32>
    %45 = vector.multi_reduction <add>, %44, %cst_19 [1] : vector<8x8xf32> to vector<8xf32>
    %46 = vector.shape_cast %45 : vector<8xf32> to vector<8x1xf32>
    %47 = tpu.reciprocal %46 {approx = true} : vector<8x1xf32> -> vector<8x1xf32>
    %48 = vector.broadcast %47 : vector<8x1xf32> to vector<8x8xf32>
    %49 = arith.mulf %44, %48 : vector<8x8xf32>
    %50 = arith.truncf %49 : vector<8x8xf32> to vector<8x8xbf16>
    %cst_20 = arith.constant dense<0.000000e+00> : vector<8x32xf32>
    %51 = tpu.matmul %50, %35, %cst_20 {dimension_numbers = #tpu.dot_dimension_numbers<[1], [0], [0], [1], [0, 0, 1, 1], [], []>} : vector<8x8xbf16>, vector<8x32xbf16>, vector<8x32xf32> -> vector<8x32xf32>
    %c0_21 = arith.constant 0 : index
    %c0_22 = arith.constant 0 : index
    %52 = vector.load %arg16[%c0_21, %c0_22] : memref<8x128xf32, #tpu.memory_space<vmem>>, vector<8x32xf32>
    tpu.vector_store %arg16[%c0_21, %c0_22], %51 {strides = array<i32>} : memref<8x128xf32, #tpu.memory_space<vmem>>, vector<8x32xf32>,
    %53 = vector.extract_strided_slice %32 {offsets = [0, 32], sizes = [8, 32], strides = [1, 1]} : vector<8x384xbf16> to vector<8x32xbf16>
    %54 = vector.extract_strided_slice %32 {offsets = [0, 160], sizes = [8, 32], strides = [1, 1]} : vector<8x384xbf16> to vector<8x32xbf16>
    %55 = vector.extract_strided_slice %32 {offsets = [0, 288], sizes = [8, 32], strides = [1, 1]} : vector<8x384xbf16> to vector<8x32xbf16>
    %cst_23 = arith.constant dense<0.000000e+00> : vector<8x8xf32>
    %56 = tpu.matmul %53, %54, %cst_23 {dimension_numbers = #tpu.dot_dimension_numbers<[1], [1], [0], [0], [0, 0, 1, 0], [], []>} : vector<8x32xbf16>, vector<8x32xbf16>, vector<8x8xf32> -> vector<8x8xf32>
    %cst_24 = arith.constant 0.176776692 : f32
    %57 = vector.broadcast %cst_24 : f32 to vector<8x8xf32>
    %58 = arith.mulf %56, %57 : vector<8x8xf32>
    %59 = arith.addf %58, %1 : vector<8x8xf32>
    %cst_25 = arith.constant dense<0xFF800000> : vector<8xf32>
    %60 = vector.multi_reduction <maximumf>, %59, %cst_25 [1] : vector<8x8xf32> to vector<8xf32>
    %61 = vector.shape_cast %60 : vector<8xf32> to vector<8x1xf32>
    %62 = vector.broadcast %61 : vector<8x1xf32> to vector<8x8xf32>
    %63 = arith.subf %59, %62 : vector<8x8xf32>
    %64 = math.exp %63 : vector<8x8xf32>
    %cst_26 = arith.constant dense<0.000000e+00> : vector<8xf32>
    %65 = vector.multi_reduction <add>, %64, %cst_26 [1] : vector<8x8xf32> to vector<8xf32>
    %66 = vector.shape_cast %65 : vector<8xf32> to vector<8x1xf32>
    %67 = tpu.reciprocal %66 {approx = true} : vector<8x1xf32> -> vector<8x1xf32>
    %68 = vector.broadcast %67 : vector<8x1xf32> to vector<8x8xf32>
    %69 = arith.mulf %64, %68 : vector<8x8xf32>
    %70 = arith.truncf %69 : vector<8x8xf32> to vector<8x8xbf16>
    %cst_27 = arith.constant dense<0.000000e+00> : vector<8x32xf32>
    %71 = tpu.matmul %70, %55, %cst_27 {dimension_numbers = #tpu.dot_dimension_numbers<[1], [0], [0], [1], [0, 0, 1, 1], [], []>} : vector<8x8xbf16>, vector<8x32xbf16>, vector<8x32xf32> -> vector<8x32xf32>
    %c0_28 = arith.constant 0 : index
    %c32 = arith.constant 32 : index
    %72 = vector.load %arg16[%c0_28, %c32] : memref<8x128xf32, #tpu.memory_space<vmem>>, vector<8x32xf32>
    tpu.vector_store %arg16[%c0_28, %c32], %71 {strides = array<i32>} : memref<8x128xf32, #tpu.memory_space<vmem>>, vector<8x32xf32>,
    %73 = vector.extract_strided_slice %32 {offsets = [0, 64], sizes = [8, 32], strides = [1, 1]} : vector<8x384xbf16> to vector<8x32xbf16>
    %74 = vector.extract_strided_slice %32 {offsets = [0, 192], sizes = [8, 32], strides = [1, 1]} : vector<8x384xbf16> to vector<8x32xbf16>
    %75 = vector.extract_strided_slice %32 {offsets = [0, 320], sizes = [8, 32], strides = [1, 1]} : vector<8x384xbf16> to vector<8x32xbf16>
    %cst_29 = arith.constant dense<0.000000e+00> : vector<8x8xf32>
    %76 = tpu.matmul %73, %74, %cst_29 {dimension_numbers = #tpu.dot_dimension_numbers<[1], [1], [0], [0], [0, 0, 1, 0], [], []>} : vector<8x32xbf16>, vector<8x32xbf16>, vector<8x8xf32> -> vector<8x8xf32>
    %cst_30 = arith.constant 0.176776692 : f32
    %77 = vector.broadcast %cst_30 : f32 to vector<8x8xf32>
    %78 = arith.mulf %76, %77 : vector<8x8xf32>
    %79 = arith.addf %78, %1 : vector<8x8xf32>
    %cst_31 = arith.constant dense<0xFF800000> : vector<8xf32>
    %80 = vector.multi_reduction <maximumf>, %79, %cst_31 [1] : vector<8x8xf32> to vector<8xf32>
    %81 = vector.shape_cast %80 : vector<8xf32> to vector<8x1xf32>
    %82 = vector.broadcast %81 : vector<8x1xf32> to vector<8x8xf32>
    %83 = arith.subf %79, %82 : vector<8x8xf32>
    %84 = math.exp %83 : vector<8x8xf32>
    %cst_32 = arith.constant dense<0.000000e+00> : vector<8xf32>
    %85 = vector.multi_reduction <add>, %84, %cst_32 [1] : vector<8x8xf32> to vector<8xf32>
    %86 = vector.shape_cast %85 : vector<8xf32> to vector<8x1xf32>
    %87 = tpu.reciprocal %86 {approx = true} : vector<8x1xf32> -> vector<8x1xf32>
    %88 = vector.broadcast %87 : vector<8x1xf32> to vector<8x8xf32>
    %89 = arith.mulf %84, %88 : vector<8x8xf32>
    %90 = arith.truncf %89 : vector<8x8xf32> to vector<8x8xbf16>
    %cst_33 = arith.constant dense<0.000000e+00> : vector<8x32xf32>
    %91 = tpu.matmul %90, %75, %cst_33 {dimension_numbers = #tpu.dot_dimension_numbers<[1], [0], [0], [1], [0, 0, 1, 1], [], []>} : vector<8x8xbf16>, vector<8x32xbf16>, vector<8x32xf32> -> vector<8x32xf32>
    %c0_34 = arith.constant 0 : index
    %c64 = arith.constant 64 : index
    %92 = vector.load %arg16[%c0_34, %c64] : memref<8x128xf32, #tpu.memory_space<vmem>>, vector<8x32xf32>
    tpu.vector_store %arg16[%c0_34, %c64], %91 {strides = array<i32>} : memref<8x128xf32, #tpu.memory_space<vmem>>, vector<8x32xf32>,
    %93 = vector.extract_strided_slice %32 {offsets = [0, 96], sizes = [8, 32], strides = [1, 1]} : vector<8x384xbf16> to vector<8x32xbf16>
    %94 = vector.extract_strided_slice %32 {offsets = [0, 224], sizes = [8, 32], strides = [1, 1]} : vector<8x384xbf16> to vector<8x32xbf16>
    %95 = vector.extract_strided_slice %32 {offsets = [0, 352], sizes = [8, 32], strides = [1, 1]} : vector<8x384xbf16> to vector<8x32xbf16>
    %cst_35 = arith.constant dense<0.000000e+00> : vector<8x8xf32>
    %96 = tpu.matmul %93, %94, %cst_35 {dimension_numbers = #tpu.dot_dimension_numbers<[1], [1], [0], [0], [0, 0, 1, 0], [], []>} : vector<8x32xbf16>, vector<8x32xbf16>, vector<8x8xf32> -> vector<8x8xf32>
    %cst_36 = arith.constant 0.176776692 : f32
    %97 = vector.broadcast %cst_36 : f32 to vector<8x8xf32>
    %98 = arith.mulf %96, %97 : vector<8x8xf32>
    %99 = arith.addf %98, %1 : vector<8x8xf32>
    %cst_37 = arith.constant dense<0xFF800000> : vector<8xf32>
    %100 = vector.multi_reduction <maximumf>, %99, %cst_37 [1] : vector<8x8xf32> to vector<8xf32>
    %101 = vector.shape_cast %100 : vector<8xf32> to vector<8x1xf32>
    %102 = vector.broadcast %101 : vector<8x1xf32> to vector<8x8xf32>
    %103 = arith.subf %99, %102 : vector<8x8xf32>
    %104 = math.exp %103 : vector<8x8xf32>
    %cst_38 = arith.constant dense<0.000000e+00> : vector<8xf32>
    %105 = vector.multi_reduction <add>, %104, %cst_38 [1] : vector<8x8xf32> to vector<8xf32>
    %106 = vector.shape_cast %105 : vector<8xf32> to vector<8x1xf32>
    %107 = tpu.reciprocal %106 {approx = true} : vector<8x1xf32> -> vector<8x1xf32>
    %108 = vector.broadcast %107 : vector<8x1xf32> to vector<8x8xf32>
    %109 = arith.mulf %104, %108 : vector<8x8xf32>
    %110 = arith.truncf %109 : vector<8x8xf32> to vector<8x8xbf16>
    %cst_39 = arith.constant dense<0.000000e+00> : vector<8x32xf32>
    %111 = tpu.matmul %110, %95, %cst_39 {dimension_numbers = #tpu.dot_dimension_numbers<[1], [0], [0], [1], [0, 0, 1, 1], [], []>} : vector<8x8xbf16>, vector<8x32xbf16>, vector<8x32xf32> -> vector<8x32xf32>
    %c0_40 = arith.constant 0 : index
    %c96 = arith.constant 96 : index
    %112 = vector.load %arg16[%c0_40, %c96] : memref<8x128xf32, #tpu.memory_space<vmem>>, vector<8x32xf32>
    tpu.vector_store %arg16[%c0_40, %c96], %111 {strides = array<i32>} : memref<8x128xf32, #tpu.memory_space<vmem>>, vector<8x32xf32>,
    %c0_41 = arith.constant 0 : index
    %c0_42 = arith.constant 0 : index
    %113 = vector.load %arg16[%c0_41, %c0_42] : memref<8x128xf32, #tpu.memory_space<vmem>>, vector<8x128xf32>
    %114 = arith.truncf %113 : vector<8x128xf32> to vector<8x128xbf16>
    %c0_43 = arith.constant 0 : index
    %c0_44 = arith.constant 0 : index
    %115 = vector.load %arg7[%c0_43, %c0_44] : memref<128x128xbf16, #tpu.memory_space<vmem>>, vector<128x128xbf16>
    %cst_45 = arith.constant dense<0.000000e+00> : vector<8x128xf32>
    %116 = tpu.matmul %114, %115, %cst_45 {dimension_numbers = #tpu.dot_dimension_numbers<[1], [0], [0], [1], [0, 0, 1, 1], [], []>} : vector<8x128xbf16>, vector<128x128xbf16>, vector<8x128xf32> -> vector<8x128xf32>
    %c0_46 = arith.constant 0 : index
    %c0_47 = arith.constant 0 : index
    %117 = vector.load %arg8[%c0_46, %c0_47] : memref<1x128xf32, #tpu.memory_space<vmem>>, vector<1x128xf32>
    %118 = vector.broadcast %117 : vector<1x128xf32> to vector<8x128xf32>
    %119 = arith.addf %116, %118 : vector<8x128xf32>
    %120 = arith.addf %0, %119 : vector<8x128xf32>
    %c0_48 = arith.constant 0 : index
    %c0_49 = arith.constant 0 : index
    %121 = vector.load %arg9[%c0_48, %c0_49] : memref<1x128xf32, #tpu.memory_space<vmem>>, vector<1x128xf32>
    %c0_50 = arith.constant 0 : index
    %c0_51 = arith.constant 0 : index
    %122 = vector.load %arg10[%c0_50, %c0_51] : memref<1x128xf32, #tpu.memory_space<vmem>>, vector<1x128xf32>
    %cst_52 = arith.constant dense<0.000000e+00> : vector<8xf32>
    %123 = vector.multi_reduction <add>, %120, %cst_52 [1] : vector<8x128xf32> to vector<8xf32>
    %124 = vector.shape_cast %123 : vector<8xf32> to vector<8x1xf32>
    %cst_53 = arith.constant 1.280000e+02 : f32
    %125 = vector.broadcast %cst_53 : f32 to vector<8x1xf32>
    %126 = arith.divf %124, %125 : vector<8x1xf32>
    %127 = vector.broadcast %126 : vector<8x1xf32> to vector<8x128xf32>
    %128 = arith.subf %120, %127 : vector<8x128xf32>
    %129 = arith.mulf %128, %128 : vector<8x128xf32>
    %cst_54 = arith.constant dense<0.000000e+00> : vector<8xf32>
    %130 = vector.multi_reduction <add>, %129, %cst_54 [1] : vector<8x128xf32> to vector<8xf32>
    %131 = vector.shape_cast %130 : vector<8xf32> to vector<8x1xf32>
    %cst_55 = arith.constant 1.280000e+02 : f32
    %132 = vector.broadcast %cst_55 : f32 to vector<8x1xf32>
    %133 = arith.divf %131, %132 : vector<8x1xf32>
    %134 = vector.broadcast %126 : vector<8x1xf32> to vector<8x128xf32>
    %135 = arith.subf %120, %134 : vector<8x128xf32>
    %cst_56 = arith.constant 9.99999974E-6 : f32
    %136 = vector.broadcast %cst_56 : f32 to vector<8x1xf32>
    %137 = arith.addf %133, %136 : vector<8x1xf32>
    %138 = math.rsqrt %137 : vector<8x1xf32>
    %139 = vector.broadcast %138 : vector<8x1xf32> to vector<8x128xf32>
    %140 = arith.mulf %135, %139 : vector<8x128xf32>
    %141 = vector.broadcast %121 : vector<1x128xf32> to vector<8x128xf32>
    %142 = arith.mulf %140, %141 : vector<8x128xf32>
    %143 = vector.broadcast %122 : vector<1x128xf32> to vector<8x128xf32>
    %144 = arith.addf %142, %143 : vector<8x128xf32>
    %145 = arith.truncf %144 : vector<8x128xf32> to vector<8x128xbf16>
    %c0_57 = arith.constant 0 : index
    %c0_58 = arith.constant 0 : index
    %146 = vector.load %arg11[%c0_57, %c0_58] : memref<128x512xbf16, #tpu.memory_space<vmem>>, vector<128x512xbf16>
    %cst_59 = arith.constant dense<0.000000e+00> : vector<8x512xf32>
    %147 = tpu.matmul %145, %146, %cst_59 {dimension_numbers = #tpu.dot_dimension_numbers<[1], [0], [0], [1], [0, 0, 1, 1], [], []>} : vector<8x128xbf16>, vector<128x512xbf16>, vector<8x512xf32> -> vector<8x512xf32>
    %c0_60 = arith.constant 0 : index
    %c0_61 = arith.constant 0 : index
    %148 = vector.load %arg12[%c0_60, %c0_61] : memref<1x512xf32, #tpu.memory_space<vmem>>, vector<1x512xf32>
    %149 = vector.broadcast %148 : vector<1x512xf32> to vector<8x512xf32>
    %150 = arith.addf %147, %149 : vector<8x512xf32>
    %cst_62 = arith.constant 5.000000e-01 : f32
    %151 = vector.broadcast %cst_62 : f32 to vector<8x512xf32>
    %152 = arith.mulf %151, %150 : vector<8x512xf32>
    %cst_63 = arith.constant 0.707106769 : f32
    %153 = vector.broadcast %cst_63 : f32 to vector<8x512xf32>
    %154 = arith.mulf %150, %153 : vector<8x512xf32>
    %155 = math.erf %154 : vector<8x512xf32>
    %cst_64 = arith.constant 1.000000e+00 : f32
    %156 = vector.broadcast %cst_64 : f32 to vector<8x512xf32>
    %157 = arith.addf %156, %155 : vector<8x512xf32>
    %158 = arith.mulf %152, %157 : vector<8x512xf32>
    %159 = arith.truncf %158 : vector<8x512xf32> to vector<8x512xbf16>
    %c0_65 = arith.constant 0 : index
    %c0_66 = arith.constant 0 : index
    %160 = vector.load %arg13[%c0_65, %c0_66] : memref<512x128xbf16, #tpu.memory_space<vmem>>, vector<512x128xbf16>
    %cst_67 = arith.constant dense<0.000000e+00> : vector<8x128xf32>
    %161 = tpu.matmul %159, %160, %cst_67 {dimension_numbers = #tpu.dot_dimension_numbers<[1], [0], [0], [1], [0, 0, 1, 1], [], []>} : vector<8x512xbf16>, vector<512x128xbf16>, vector<8x128xf32> -> vector<8x128xf32>
    %c0_68 = arith.constant 0 : index
    %c0_69 = arith.constant 0 : index
    %162 = vector.load %arg14[%c0_68, %c0_69] : memref<1x128xf32, #tpu.memory_space<vmem>>, vector<1x128xf32>
    %163 = vector.broadcast %162 : vector<1x128xf32> to vector<8x128xf32>
    %164 = arith.addf %161, %163 : vector<8x128xf32>
    %165 = arith.addf %120, %164 : vector<8x128xf32>
    %c0_70 = arith.constant 0 : index
    %c0_71 = arith.constant 0 : index
    %166 = vector.load %arg15[%c0_70, %c0_71] : memref<8x128xf32, #tpu.memory_space<vmem>>, vector<8x128xf32>
    tpu.vector_store %arg15[%c0_70, %c0_71], %165 {strides = array<i32>} : memref<8x128xf32, #tpu.memory_space<vmem>>, vector<8x128xf32>,
    return
  }
  func.func @transform_0(%arg0: i32) -> (i32, i32) {
    %c0_i32 = arith.constant 0 : i32
    %c0_i32_0 = arith.constant 0 : i32
    return %arg0, %c0_i32 : i32, i32
  }
  func.func @transform_1(%arg0: i32) -> (i32, i32) {
    %c0_i32 = arith.constant 0 : i32
    %c0_i32_0 = arith.constant 0 : i32
    %c0_i32_1 = arith.constant 0 : i32
    return %c0_i32, %c0_i32_0 : i32, i32
  }
  func.func @transform_2(%arg0: i32) -> (i32, i32) {
    %c0_i32 = arith.constant 0 : i32
    %c0_i32_0 = arith.constant 0 : i32
    %c0_i32_1 = arith.constant 0 : i32
    return %c0_i32, %c0_i32_0 : i32, i32
  }
  func.func @transform_3(%arg0: i32) -> (i32, i32) {
    %c0_i32 = arith.constant 0 : i32
    %c0_i32_0 = arith.constant 0 : i32
    %c0_i32_1 = arith.constant 0 : i32
    return %c0_i32, %c0_i32_0 : i32, i32
  }
  func.func @transform_4(%arg0: i32) -> (i32, i32) {
    %c0_i32 = arith.constant 0 : i32
    %c0_i32_0 = arith.constant 0 : i32
    %c0_i32_1 = arith.constant 0 : i32
    return %c0_i32, %c0_i32_0 : i32, i32
  }
  func.func @transform_5(%arg0: i32) -> (i32, i32) {
    %c0_i32 = arith.constant 0 : i32
    %c0_i32_0 = arith.constant 0 : i32
    %c0_i32_1 = arith.constant 0 : i32
    return %c0_i32, %c0_i32_0 : i32, i32
  }
  func.func @transform_6(%arg0: i32) -> (i32, i32) {
    %c0_i32 = arith.constant 0 : i32
    %c0_i32_0 = arith.constant 0 : i32
    %c0_i32_1 = arith.constant 0 : i32
    return %c0_i32, %c0_i32_0 : i32, i32
  }
  func.func @transform_7(%arg0: i32) -> (i32, i32) {
    %c0_i32 = arith.constant 0 : i32
    %c0_i32_0 = arith.constant 0 : i32
    %c0_i32_1 = arith.constant 0 : i32
    return %c0_i32, %c0_i32_0 : i32, i32
  }
  func.func @transform_8(%arg0: i32) -> (i32, i32) {
    %c0_i32 = arith.constant 0 : i32
    %c0_i32_0 = arith.constant 0 : i32
    %c0_i32_1 = arith.constant 0 : i32
    return %c0_i32, %c0_i32_0 : i32, i32
  }
  func.func @transform_9(%arg0: i32) -> (i32, i32) {
    %c0_i32 = arith.constant 0 : i32
    %c0_i32_0 = arith.constant 0 : i32
    %c0_i32_1 = arith.constant 0 : i32
    return %c0_i32, %c0_i32_0 : i32, i32
  }
  func.func @transform_10(%arg0: i32) -> (i32, i32) {
    %c0_i32 = arith.constant 0 : i32
    %c0_i32_0 = arith.constant 0 : i32
    %c0_i32_1 = arith.constant 0 : i32
    return %c0_i32, %c0_i32_0 : i32, i32
  }
  func.func @transform_11(%arg0: i32) -> (i32, i32) {
    %c0_i32 = arith.constant 0 : i32
    %c0_i32_0 = arith.constant 0 : i32
    %c0_i32_1 = arith.constant 0 : i32
    return %c0_i32, %c0_i32_0 : i32, i32
  }
  func.func @transform_12(%arg0: i32) -> (i32, i32) {
    %c0_i32 = arith.constant 0 : i32
    %c0_i32_0 = arith.constant 0 : i32
    %c0_i32_1 = arith.constant 0 : i32
    return %c0_i32, %c0_i32_0 : i32, i32
  }
  func.func @transform_13(%arg0: i32) -> (i32, i32) {
    %c0_i32 = arith.constant 0 : i32
    %c0_i32_0 = arith.constant 0 : i32
    %c0_i32_1 = arith.constant 0 : i32
    return %c0_i32, %c0_i32_0 : i32, i32
  }
  func.func @transform_14(%arg0: i32) -> (i32, i32) {
    %c0_i32 = arith.constant 0 : i32
    %c0_i32_0 = arith.constant 0 : i32
    return %arg0, %c0_i32 : i32, i32
  }
}

</mosaic_0001>

<llo_original>
// kernel: tpu_custom_call.1
$region0: #{tpu_custom_call.1}
  #allocation0 [shape = 'u32[]', space=smem, size = 0x4, offset = 0x4, fixed_abs, tag = 'smem constant byte address 0x4 - core index']
  #allocation1 [shape = 'u32[144,128]{1,0:T(1,128)}', space=vmem, size = 0x12000, scoped, tag = 'internal scratch']
  #allocation2 [shape = 'f32[8,128]{1,0:T(8,128)}', space=vmem, size = 0x1000, scoped, tag = 'scratch operand']
  %s0 = inlined_call_operand.hbm [shape: f32[16,128], index: 0, kind: input, shape index: {}]
  %s1 = inlined_call_operand.hbm [shape: f32[8,8], index: 1, kind: input, shape index: {}]
  %s2 = inlined_call_operand.hbm [shape: f32[1,128], index: 2, kind: input, shape index: {}]
  %s3 = inlined_call_operand.hbm [shape: f32[1,128], index: 3, kind: input, shape index: {}]
  %s4 = inlined_call_operand.hbm [shape: bf16[128,384], index: 4, kind: input, shape index: {}]
  %s5 = inlined_call_operand.vmem [shape: f32[1,384], index: 5, kind: input, shape index: {}]
  %s6 = inlined_call_operand.hbm [shape: bf16[128,128], index: 6, kind: input, shape index: {}]
  %s7 = inlined_call_operand.vmem [shape: f32[1,128], index: 7, kind: input, shape index: {}]
  %s8 = inlined_call_operand.vmem [shape: f32[1,128], index: 8, kind: input, shape index: {}]
  %s9 = inlined_call_operand.vmem [shape: f32[1,128], index: 9, kind: input, shape index: {}]
  %s10 = inlined_call_operand.hbm [shape: bf16[128,512], index: 10, kind: input, shape index: {}]
  %s11 = inlined_call_operand.vmem [shape: f32[1,512], index: 11, kind: input, shape index: {}]
  %s12 = inlined_call_operand.hbm [shape: bf16[512,128], index: 12, kind: input, shape index: {}]
  %s13 = inlined_call_operand.vmem [shape: f32[1,128], index: 13, kind: input, shape index: {}]
  %s14 = inlined_call_operand.hbm [shape: f32[16,128], index: 14, kind: output, shape index: {}]
  %s15 = sld [smem:[#allocation0]]
  $region121: #{tpu_custom_call.1} parent=0
    _
  %s17 = ssub.s32 1, %s15
  %s18 = scalar_select 0, %s17, %s15
  $region1: #{tpu_custom_call.1} parent=0
    #allocation3 [shape = 'u8[8192]{0}', space=vmem, size = 0x2000, scoped, tag = 'input window, operand 0']
    #allocation4 [shape = 's32[2]{0}', space=sflag, size = 0x8, scoped, tag = 'scoped memory for tpu_custom_call.1']
    #allocation5 [shape = 's32[2]{0}', space=sflag, size = 0x8, scoped, tag = 'scoped memory for tpu_custom_call.1']
    #allocation6 [shape = 'u8[4096]{0}', space=vmem, size = 0x1000, scoped, tag = 'input window, operand 1, single buffered']
    #allocation7 [shape = 's32[1]{0}', space=sflag, size = 0x4, scoped, tag = 'scoped memory for tpu_custom_call.1']
    #allocation8 [shape = 'u8[512]{0}', space=vmem, size = 0x400, scoped, tag = 'input window, operand 2, single buffered']
    #allocation9 [shape = 'u8[512]{0}', space=vmem, size = 0x400, scoped, tag = 'input window, operand 3, single buffered']
    #allocation10 [shape = 's32[1]{0}', space=sflag, size = 0x4, scoped, tag = 'scoped memory for tpu_custom_call.1']
    #allocation11 [shape = 'u8[98304]{0}', space=vmem, size = 0x18000, scoped, tag = 'input window, operand 4, single buffered']
    #allocation12 [shape = 'u8[32768]{0}', space=vmem, size = 0x8000, scoped, tag = 'input window, operand 6, single buffered']
    #allocation13 [shape = 's32[1]{0}', space=sflag, size = 0x4, scoped, tag = 'scoped memory for tpu_custom_call.1']
    #allocation14 [shape = 'u8[131072]{0}', space=vmem, size = 0x20000, scoped, tag = 'input window, operand 10, single buffered']
    #allocation15 [shape = 'u8[131072]{0}', space=vmem, size = 0x20000, scoped, tag = 'input window, operand 12, single buffered']
    #allocation16 [shape = 's32[1]{0}', space=sflag, size = 0x4, scoped, tag = 'scoped memory for tpu_custom_call.1']
    #allocation17 [shape = 'u8[8192]{0}', space=vmem, size = 0x2000, scoped, tag = 'output window, operand 0']
    %19 = vsyncpa [#allocation4], 0
    %s20 = scalar_lea.sflag [#allocation4], 1
    %21 = vsyncpa %s20, 0
    %22 = vsyncpa [#allocation7], 0
    %23 = vsyncpa [#allocation10], 0
    %24 = vsyncpa [#allocation13], 0
    %25 = vsyncpa [#allocation16], 0
    %26 = vsyncpa [#allocation5], 0
    %s27 = scalar_lea.sflag [#allocation5], 1
    %28 = vsyncpa %s27, 0
    loop: start=0, step=1, limit=4
    $region2: #{tpu_custom_call.1} parent=1 // loop_pre_header
      _
    $region3: #{tpu_custom_call.1} parent=1 // loop_header
      %s30 = sphi 0, %s34
      %p31 = scmp.ge.s32.totalorder %s30, 4
      %s40 = sphi 0, %s42
      %s43 = sphi 0, %s40
      %s44 = sphi 0, %s43
      %s60 = sphi 0, %s44
      %s64 = sphi 0, %s64
      %s66 = sphi 0, %s64
      %s67 = sphi 0, %s66
      %s81 = sphi 0, %s67
      %s85 = sphi 0, %s85
      %s87 = sphi 0, %s85
      %s88 = sphi 0, %s87
      %s102 = sphi 0, %s88
      %s106 = sphi 0, %s106
      %s108 = sphi 0, %s106
      %s109 = sphi 0, %s108
      %s123 = sphi 0, %s109
      %s127 = sphi 0, %s127
      %s129 = sphi 0, %s127
      %s130 = sphi 0, %s129
      %s144 = sphi 0, %s130
      %s148 = sphi 0, %s148
      %s150 = sphi 0, %s148
      %s151 = sphi 0, %s150
      %s165 = sphi 0, %s151
      %s169 = sphi 0, %s169
      %s171 = sphi 0, %s169
      %s172 = sphi 0, %s171
      %s186 = sphi 0, %s172
      %s190 = sphi 0, %s190
      %s192 = sphi 0, %s190
      %s193 = sphi 0, %s192
      %s207 = sphi 0, %s193
      %s211 = sphi 0, %s211
      %s213 = sphi 0, %s211
      %s214 = sphi 0, %s213
      %s228 = sphi 0, %s214
      %s232 = sphi 0, %s232
      %s234 = sphi 0, %s232
      %s235 = sphi 0, %s234
      %s249 = sphi 0, %s235
      %s253 = sphi 0, %s253
      %s255 = sphi 0, %s253
      %s256 = sphi 0, %s255
      %s270 = sphi 0, %s256
      %s274 = sphi 0, %s274
      %s276 = sphi 0, %s274
      %s277 = sphi 0, %s276
      %s291 = sphi 0, %s277
      %s295 = sphi 0, %s295
      %s297 = sphi 0, %s295
      %s298 = sphi 0, %s297
      %s312 = sphi 0, %s298
      %s316 = sphi 0, %s316
      %s318 = sphi 0, %s316
      %s319 = sphi 0, %s318
      %s333 = sphi 0, %s319
      %s339 = sphi 0, %s341
      %s342 = sphi 0, %s339
      %s343 = sphi 0, %s342
      %s359 = sphi 0, %s343
    $region4: #{tpu_custom_call.1} parent=1 // loop_header_branch
      %33 = sbr.rel (%p31) target = $region8
    $region5: #{tpu_custom_call.1} parent=1 // loop_body
      %s35 = ssub.s32 %s30, 1
      %s36 = ssub.s32 %s30, 2
      %s37 = sadd.s32 %s30, 1
      %s38 = ssub.s32 %s30, %s37
      %p39 = scmp.eq.s32.totalorder %s38, 0
      %s41 = sadd.s32 %s40, 1
      %s42 = scalar_select %p39, %s40, %s41
      %p45 = pneg %p39
      %p46 = scmp.eq.s32.totalorder %s30, 1
      %p47 = por %p45, %p46
      %p48 = scmp.ne.s32.totalorder %s40, %s43
      %p49 = scmp.eq.s32.totalorder %s30, 0
      %p50 = por %p48, %p49
      %p51 = scmp.ne.s32.totalorder %s40, %s43
      %p52 = scmp.eq.s32.totalorder %s35, 1
      %p53 = por %p51, %p52
      %p54 = scmp.ne.s32.totalorder %s43, %s44
      %p55 = scmp.eq.s32.totalorder %s35, 0
      %p56 = por %p54, %p55
      %p57 = scmp.ne.s32.totalorder %s43, %s44
      %p58 = scmp.eq.s32.totalorder %s36, 1
      %p59 = por %p57, %p58
      %p61 = scmp.ne.s32.totalorder %s44, %s60
      %p62 = scmp.eq.s32.totalorder %s36, 0
      %p63 = por %p61, %p62
      %s65 = sadd.s32 %s64, 1
      %p68 = scmp.eq.s32.totalorder %s30, 1
      %p69 = scmp.ne.s32.totalorder %s64, %s66
      %p70 = scmp.eq.s32.totalorder %s30, 0
      %p71 = por %p69, %p70
      %p72 = scmp.ne.s32.totalorder %s64, %s66
      %p73 = scmp.eq.s32.totalorder %s35, 1
      %p74 = por %p72, %p73
      %p75 = scmp.ne.s32.totalorder %s66, %s67
      %p76 = scmp.eq.s32.totalorder %s35, 0
      %p77 = por %p75, %p76
      %p78 = scmp.ne.s32.totalorder %s66, %s67
      %p79 = scmp.eq.s32.totalorder %s36, 1
      %p80 = por %p78, %p79
      %p82 = scmp.ne.s32.totalorder %s67, %s81
      %p83 = scmp.eq.s32.totalorder %s36, 0
      %p84 = por %p82, %p83
      %s86 = sadd.s32 %s85, 1
      %p89 = scmp.eq.s32.totalorder %s30, 1
      %p90 = scmp.ne.s32.totalorder %s85, %s87
      %p91 = scmp.eq.s32.totalorder %s30, 0
      %p92 = por %p90, %p91
      %p93 = scmp.ne.s32.totalorder %s85, %s87
      %p94 = scmp.eq.s32.totalorder %s35, 1
      %p95 = por %p93, %p94
      %p96 = scmp.ne.s32.totalorder %s87, %s88
      %p97 = scmp.eq.s32.totalorder %s35, 0
      %p98 = por %p96, %p97
      %p99 = scmp.ne.s32.totalorder %s87, %s88
      %p100 = scmp.eq.s32.totalorder %s36, 1
      %p101 = por %p99, %p100
      %p103 = scmp.ne.s32.totalorder %s88, %s102
      %p104 = scmp.eq.s32.totalorder %s36, 0
      %p105 = por %p103, %p104
      %s107 = sadd.s32 %s106, 1
      %p110 = scmp.eq.s32.totalorder %s30, 1
      %p111 = scmp.ne.s32.totalorder %s106, %s108
      %p112 = scmp.eq.s32.totalorder %s30, 0
      %p113 = por %p111, %p112
      %p114 = scmp.ne.s32.totalorder %s106, %s108
      %p115 = scmp.eq.s32.totalorder %s35, 1
      %p116 = por %p114, %p115
      %p117 = scmp.ne.s32.totalorder %s108, %s109
      %p118 = scmp.eq.s32.totalorder %s35, 0
      %p119 = por %p117, %p118
      %p120 = scmp.ne.s32.totalorder %s108, %s109
      %p121 = scmp.eq.s32.totalorder %s36, 1
      %p122 = por %p120, %p121
      %p124 = scmp.ne.s32.totalorder %s109, %s123
      %p125 = scmp.eq.s32.totalorder %s36, 0
      %p126 = por %p124, %p125
      %s128 = sadd.s32 %s127, 1
      %p131 = scmp.eq.s32.totalorder %s30, 1
      %p132 = scmp.ne.s32.totalorder %s127, %s129
      %p133 = scmp.eq.s32.totalorder %s30, 0
      %p134 = por %p132, %p133
      %p135 = scmp.ne.s32.totalorder %s127, %s129
      %p136 = scmp.eq.s32.totalorder %s35, 1
      %p137 = por %p135, %p136
      %p138 = scmp.ne.s32.totalorder %s129, %s130
      %p139 = scmp.eq.s32.totalorder %s35, 0
      %p140 = por %p138, %p139
      %p141 = scmp.ne.s32.totalorder %s129, %s130
      %p142 = scmp.eq.s32.totalorder %s36, 1
      %p143 = por %p141, %p142
      %p145 = scmp.ne.s32.totalorder %s130, %s144
      %p146 = scmp.eq.s32.totalorder %s36, 0
      %p147 = por %p145, %p146
      %s149 = sadd.s32 %s148, 1
      %p152 = scmp.eq.s32.totalorder %s30, 1
      %p153 = scmp.ne.s32.totalorder %s148, %s150
      %p154 = scmp.eq.s32.totalorder %s30, 0
      %p155 = por %p153, %p154
      %p156 = scmp.ne.s32.totalorder %s148, %s150
      %p157 = scmp.eq.s32.totalorder %s35, 1
      %p158 = por %p156, %p157
      %p159 = scmp.ne.s32.totalorder %s150, %s151
      %p160 = scmp.eq.s32.totalorder %s35, 0
      %p161 = por %p159, %p160
      %p162 = scmp.ne.s32.totalorder %s150, %s151
      %p163 = scmp.eq.s32.totalorder %s36, 1
      %p164 = por %p162, %p163
      %p166 = scmp.ne.s32.totalorder %s151, %s165
      %p167 = scmp.eq.s32.totalorder %s36, 0
      %p168 = por %p166, %p167
      %s170 = sadd.s32 %s169, 1
      %p173 = scmp.eq.s32.totalorder %s30, 1
      %p174 = scmp.ne.s32.totalorder %s169, %s171
      %p175 = scmp.eq.s32.totalorder %s30, 0
      %p176 = por %p174, %p175
      %p177 = scmp.ne.s32.totalorder %s169, %s171
      %p178 = scmp.eq.s32.totalorder %s35, 1
      %p179 = por %p177, %p178
      %p180 = scmp.ne.s32.totalorder %s171, %s172
      %p181 = scmp.eq.s32.totalorder %s35, 0
      %p182 = por %p180, %p181
      %p183 = scmp.ne.s32.totalorder %s171, %s172
      %p184 = scmp.eq.s32.totalorder %s36, 1
      %p185 = por %p183, %p184
      %p187 = scmp.ne.s32.totalorder %s172, %s186
      %p188 = scmp.eq.s32.totalorder %s36, 0
      %p189 = por %p187, %p188
      %s191 = sadd.s32 %s190, 1
      %p194 = scmp.eq.s32.totalorder %s30, 1
      %p195 = scmp.ne.s32.totalorder %s190, %s192
      %p196 = scmp.eq.s32.totalorder %s30, 0
      %p197 = por %p195, %p196
      %p198 = scmp.ne.s32.totalorder %s190, %s192
      %p199 = scmp.eq.s32.totalorder %s35, 1
      %p200 = por %p198, %p199
      %p201 = scmp.ne.s32.totalorder %s192, %s193
      %p202 = scmp.eq.s32.totalorder %s35, 0
      %p203 = por %p201, %p202
      %p204 = scmp.ne.s32.totalorder %s192, %s193
      %p205 = scmp.eq.s32.totalorder %s36, 1
      %p206 = por %p204, %p205
      %p208 = scmp.ne.s32.totalorder %s193, %s207
      %p209 = scmp.eq.s32.totalorder %s36, 0
      %p210 = por %p208, %p209
      %s212 = sadd.s32 %s211, 1
      %p215 = scmp.eq.s32.totalorder %s30, 1
      %p216 = scmp.ne.s32.totalorder %s211, %s213
      %p217 = scmp.eq.s32.totalorder %s30, 0
      %p218 = por %p216, %p217
      %p219 = scmp.ne.s32.totalorder %s211, %s213
      %p220 = scmp.eq.s32.totalorder %s35, 1
      %p221 = por %p219, %p220
      %p222 = scmp.ne.s32.totalorder %s213, %s214
      %p223 = scmp.eq.s32.totalorder %s35, 0
      %p224 = por %p222, %p223
      %p225 = scmp.ne.s32.totalorder %s213, %s214
      %p226 = scmp.eq.s32.totalorder %s36, 1
      %p227 = por %p225, %p226
      %p229 = scmp.ne.s32.totalorder %s214, %s228
      %p230 = scmp.eq.s32.totalorder %s36, 0
      %p231 = por %p229, %p230
      %s233 = sadd.s32 %s232, 1
      %p236 = scmp.eq.s32.totalorder %s30, 1
      %p237 = scmp.ne.s32.totalorder %s232, %s234
      %p238 = scmp.eq.s32.totalorder %s30, 0
      %p239 = por %p237, %p238
      %p240 = scmp.ne.s32.totalorder %s232, %s234
      %p241 = scmp.eq.s32.totalorder %s35, 1
      %p242 = por %p240, %p241
      %p243 = scmp.ne.s32.totalorder %s234, %s235
      %p244 = scmp.eq.s32.totalorder %s35, 0
      %p245 = por %p243, %p244
      %p246 = scmp.ne.s32.totalorder %s234, %s235
      %p247 = scmp.eq.s32.totalorder %s36, 1
      %p248 = por %p246, %p247
      %p250 = scmp.ne.s32.totalorder %s235, %s249
      %p251 = scmp.eq.s32.totalorder %s36, 0
      %p252 = por %p250, %p251
      %s254 = sadd.s32 %s253, 1
      %p257 = scmp.eq.s32.totalorder %s30, 1
      %p258 = scmp.ne.s32.totalorder %s253, %s255
      %p259 = scmp.eq.s32.totalorder %s30, 0
      %p260 = por %p258, %p259
      %p261 = scmp.ne.s32.totalorder %s253, %s255
      %p262 = scmp.eq.s32.totalorder %s35, 1
      %p263 = por %p261, %p262
      %p264 = scmp.ne.s32.totalorder %s255, %s256
      %p265 = scmp.eq.s32.totalorder %s35, 0
      %p266 = por %p264, %p265
      %p267 = scmp.ne.s32.totalorder %s255, %s256
      %p268 = scmp.eq.s32.totalorder %s36, 1
      %p269 = por %p267, %p268
      %p271 = scmp.ne.s32.totalorder %s256, %s270
      %p272 = scmp.eq.s32.totalorder %s36, 0
      %p273 = por %p271, %p272
      %s275 = sadd.s32 %s274, 1
      %p278 = scmp.eq.s32.totalorder %s30, 1
      %p279 = scmp.ne.s32.totalorder %s274, %s276
      %p280 = scmp.eq.s32.totalorder %s30, 0
      %p281 = por %p279, %p280
      %p282 = scmp.ne.s32.totalorder %s274, %s276
      %p283 = scmp.eq.s32.totalorder %s35, 1
      %p284 = por %p282, %p283
      %p285 = scmp.ne.s32.totalorder %s276, %s277
      %p286 = scmp.eq.s32.totalorder %s35, 0
      %p287 = por %p285, %p286
      %p288 = scmp.ne.s32.totalorder %s276, %s277
      %p289 = scmp.eq.s32.totalorder %s36, 1
      %p290 = por %p288, %p289
      %p292 = scmp.ne.s32.totalorder %s277, %s291
      %p293 = scmp.eq.s32.totalorder %s36, 0
      %p294 = por %p292, %p293
      %s296 = sadd.s32 %s295, 1
      %p299 = scmp.eq.s32.totalorder %s30, 1
      %p300 = scmp.ne.s32.totalorder %s295, %s297
      %p301 = scmp.eq.s32.totalorder %s30, 0
      %p302 = por %p300, %p301
      %p303 = scmp.ne.s32.totalorder %s295, %s297
      %p304 = scmp.eq.s32.totalorder %s35, 1
      %p305 = por %p303, %p304
      %p306 = scmp.ne.s32.totalorder %s297, %s298
      %p307 = scmp.eq.s32.totalorder %s35, 0
      %p308 = por %p306, %p307
      %p309 = scmp.ne.s32.totalorder %s297, %s298
      %p310 = scmp.eq.s32.totalorder %s36, 1
      %p311 = por %p309, %p310
      %p313 = scmp.ne.s32.totalorder %s298, %s312
      %p314 = scmp.eq.s32.totalorder %s36, 0
      %p315 = por %p313, %p314
      %s317 = sadd.s32 %s316, 1
      %p320 = scmp.eq.s32.totalorder %s30, 1
      %p321 = scmp.ne.s32.totalorder %s316, %s318
      %p322 = scmp.eq.s32.totalorder %s30, 0
      %p323 = por %p321, %p322
      %p324 = scmp.ne.s32.totalorder %s316, %s318
      %p325 = scmp.eq.s32.totalorder %s35, 1
      %p326 = por %p324, %p325
      %p327 = scmp.ne.s32.totalorder %s318, %s319
      %p328 = scmp.eq.s32.totalorder %s35, 0
      %p329 = por %p327, %p328
      %p330 = scmp.ne.s32.totalorder %s318, %s319
      %p331 = scmp.eq.s32.totalorder %s36, 1
      %p332 = por %p330, %p331
      %p334 = scmp.ne.s32.totalorder %s319, %s333
      %p335 = scmp.eq.s32.totalorder %s36, 0
      %p336 = por %p334, %p335
      %s337 = ssub.s32 %s30, %s37
      %p338 = scmp.eq.s32.totalorder %s337, 0
      %s340 = sadd.s32 %s339, 1
      %s341 = scalar_select %p338, %s339, %s340
      %p344 = pneg %p338
      %p345 = scmp.eq.s32.totalorder %s30, 1
      %p346 = por %p344, %p345
      %p347 = scmp.ne.s32.totalorder %s339, %s342
      %p348 = scmp.eq.s32.totalorder %s30, 0
      %p349 = por %p347, %p348
      %p350 = scmp.ne.s32.totalorder %s339, %s342
      %p351 = scmp.eq.s32.totalorder %s35, 1
      %p352 = por %p350, %p351
      %p353 = scmp.ne.s32.totalorder %s342, %s343
      %p354 = scmp.eq.s32.totalorder %s35, 0
      %p355 = por %p353, %p354
      %p356 = scmp.ne.s32.totalorder %s342, %s343
      %p357 = scmp.eq.s32.totalorder %s36, 1
      %p358 = por %p356, %p357
      %p360 = scmp.ne.s32.totalorder %s343, %s359
      %p361 = scmp.eq.s32.totalorder %s36, 0
      %p362 = por %p360, %p361
      %p363 = scmp.le.s32.totalorder 1, %s30
      %p364 = scmp.lt.s32.totalorder %s30, 3
      %p365 = pnand %p363, %p364
      %p366 = pneg %p365
      // Predicated region
      $region9: #{tpu_custom_call.1} parent=5 // pred_check
        _
      $region10: #{tpu_custom_call.1} parent=5 // pred_check_branch
        %368 = sbr.rel (%p365) target = $region12
      $region11: #{tpu_custom_call.1} parent=5 // pred_region
        %s369 = ssub.s32 %s30, 1
        // Predicated region
        $region13: #{tpu_custom_call.1} parent=11 // pred_check
          %p370 = pneg %p77
        $region14: #{tpu_custom_call.1} parent=11 // pred_check_branch
          %372 = sbr.rel (%p370) target = $region16
        $region15: #{tpu_custom_call.1} parent=11 // pred_region
          %s374 = ssub.s32 128, 128
          %375 = vsyncadd [#allocation7], %s374
          %s377 = sshll.u32 [#allocation6], 4
          %s378 = int_to_ptr.vmem [resolvable:$true] %s377
          %380 = dma.hbm_to_vmem [thread:$0]  %s1, 128, %s378, [#allocation7]
        $region16: #{tpu_custom_call.1} parent=11 // pred_fallthru
          _
        // Predicated region
        $region17: #{tpu_custom_call.1} parent=11 // pred_check
          %p381 = pneg %p98
        $region18: #{tpu_custom_call.1} parent=11 // pred_check_branch
          %383 = sbr.rel (%p381) target = $region20
        $region19: #{tpu_custom_call.1} parent=11 // pred_region
          %s385 = ssub.s32 16, 16
          %386 = vsyncadd [#allocation7], %s385
          %s388 = sshll.u32 [#allocation8], 4
          %s389 = int_to_ptr.vmem [resolvable:$true] %s388
          %391 = dma.hbm_to_vmem [thread:$0]  %s2, 16, %s389, [#allocation7]
        $region20: #{tpu_custom_call.1} parent=11 // pred_fallthru
          _
        // Predicated region
        $region21: #{tpu_custom_call.1} parent=11 // pred_check
          %p392 = pneg %p119
        $region22: #{tpu_custom_call.1} parent=11 // pred_check_branch
          %394 = sbr.rel (%p392) target = $region24
        $region23: #{tpu_custom_call.1} parent=11 // pred_region
          %s396 = ssub.s32 16, 16
          %397 = vsyncadd [#allocation10], %s396
          %s399 = sshll.u32 [#allocation9], 4
          %s400 = int_to_ptr.vmem [resolvable:$true] %s399
          %402 = dma.hbm_to_vmem [thread:$0]  %s3, 16, %s400, [#allocation10]
        $region24: #{tpu_custom_call.1} parent=11 // pred_fallthru
          _
        // Predicated region
        $region25: #{tpu_custom_call.1} parent=11 // pred_check
          %p403 = pneg %p140
        $region26: #{tpu_custom_call.1} parent=11 // pred_check_branch
          %405 = sbr.rel (%p403) target = $region28
        $region27: #{tpu_custom_call.1} parent=11 // pred_region
          %s407 = ssub.s32 3072, 3072
          %408 = vsyncadd [#allocation10], %s407
          %s409 = sshll.u32 [#allocation11], 4
          %s410 = int_to_ptr.vmem [resolvable:$true] %s409
          %415 = dma.hbm_to_vmem [thread:$0]  %s4, 3072, %s410, [#allocation10], 192, 192, 12
        $region28: #{tpu_custom_call.1} parent=11 // pred_fallthru
          _
        // Predicated region
        $region29: #{tpu_custom_call.1} parent=11 // pred_check
          %p416 = pneg %p161
        $region30: #{tpu_custom_call.1} parent=11 // pred_check_branch
          %418 = sbr.rel (%p416) target = $region32
        $region31: #{tpu_custom_call.1} parent=11 // pred_region
          _
        $region32: #{tpu_custom_call.1} parent=11 // pred_fallthru
          _
        // Predicated region
        $region33: #{tpu_custom_call.1} parent=11 // pred_check
          %p419 = pneg %p182
        $region34: #{tpu_custom_call.1} parent=11 // pred_check_branch
          %421 = sbr.rel (%p419) target = $region36
        $region35: #{tpu_custom_call.1} parent=11 // pred_region
          %s423 = ssub.s32 1024, 1024
          %424 = vsyncadd [#allocation13], %s423
          %s425 = sshll.u32 [#allocation12], 4
          %s426 = int_to_ptr.vmem [resolvable:$true] %s425
          %431 = dma.hbm_to_vmem [thread:$0]  %s6, 1024, %s426, [#allocation13], 64, 64, 4
        $region36: #{tpu_custom_call.1} parent=11 // pred_fallthru
          _
        // Predicated region
        $region37: #{tpu_custom_call.1} parent=11 // pred_check
          %p432 = pneg %p203
        $region38: #{tpu_custom_call.1} parent=11 // pred_check_branch
          %434 = sbr.rel (%p432) target = $region40
        $region39: #{tpu_custom_call.1} parent=11 // pred_region
          _
        $region40: #{tpu_custom_call.1} parent=11 // pred_fallthru
          _
        // Predicated region
        $region41: #{tpu_custom_call.1} parent=11 // pred_check
          %p435 = pneg %p224
        $region42: #{tpu_custom_call.1} parent=11 // pred_check_branch
          %437 = sbr.rel (%p435) target = $region44
        $region43: #{tpu_custom_call.1} parent=11 // pred_region
          _
        $region44: #{tpu_custom_call.1} parent=11 // pred_fallthru
          _
        // Predicated region
        $region45: #{tpu_custom_call.1} parent=11 // pred_check
          %p438 = pneg %p245
        $region46: #{tpu_custom_call.1} parent=11 // pred_check_branch
          %440 = sbr.rel (%p438) target = $region48
        $region47: #{tpu_custom_call.1} parent=11 // pred_region
          _
        $region48: #{tpu_custom_call.1} parent=11 // pred_fallthru
          _
        // Predicated region
        $region49: #{tpu_custom_call.1} parent=11 // pred_check
          %p441 = pneg %p266
        $region50: #{tpu_custom_call.1} parent=11 // pred_check_branch
          %443 = sbr.rel (%p441) target = $region52
        $region51: #{tpu_custom_call.1} parent=11 // pred_region
          %s445 = ssub.s32 4096, 4096
          %446 = vsyncadd [#allocation13], %s445
          %s447 = sshll.u32 [#allocation14], 4
          %s448 = int_to_ptr.vmem [resolvable:$true] %s447
          %453 = dma.hbm_to_vmem [thread:$0]  %s10, 4096, %s448, [#allocation13], 256, 256, 16
        $region52: #{tpu_custom_call.1} parent=11 // pred_fallthru
          _
        // Predicated region
        $region53: #{tpu_custom_call.1} parent=11 // pred_check
          %p454 = pneg %p287
        $region54: #{tpu_custom_call.1} parent=11 // pred_check_branch
          %456 = sbr.rel (%p454) target = $region56
        $region55: #{tpu_custom_call.1} parent=11 // pred_region
          _
        $region56: #{tpu_custom_call.1} parent=11 // pred_fallthru
          _
        // Predicated region
        $region57: #{tpu_custom_call.1} parent=11 // pred_check
          %p457 = pneg %p308
        $region58: #{tpu_custom_call.1} parent=11 // pred_check_branch
          %459 = sbr.rel (%p457) target = $region60
        $region59: #{tpu_custom_call.1} parent=11 // pred_region
          %s461 = ssub.s32 4096, 4096
          %462 = vsyncadd [#allocation16], %s461
          %s463 = sshll.u32 [#allocation15], 4
          %s464 = int_to_ptr.vmem [resolvable:$true] %s463
          %469 = dma.hbm_to_vmem [thread:$0]  %s12, 4096, %s464, [#allocation16], 64, 64, 4
        $region60: #{tpu_custom_call.1} parent=11 // pred_fallthru
          _
        // Predicated region
        $region61: #{tpu_custom_call.1} parent=11 // pred_check
          %p470 = pneg %p329
        $region62: #{tpu_custom_call.1} parent=11 // pred_check_branch
          %472 = sbr.rel (%p470) target = $region64
        $region63: #{tpu_custom_call.1} parent=11 // pred_region
          _
        $region64: #{tpu_custom_call.1} parent=11 // pred_fallthru
          _
      $region12: #{tpu_custom_call.1} parent=5 // pred_fallthru
        _
      %p473 = scmp.lt.s32.totalorder %s30, 2
      // Predicated region
      $region65: #{tpu_custom_call.1} parent=5 // pred_check
        %p474 = pneg %p473
      $region66: #{tpu_custom_call.1} parent=5 // pred_check_branch
        %476 = sbr.rel (%p474) target = $region68
      $region67: #{tpu_custom_call.1} parent=5 // pred_region
        // Predicated region
        $region69: #{tpu_custom_call.1} parent=67 // pred_check
          %p477 = pneg %p50
        $region70: #{tpu_custom_call.1} parent=67 // pred_check_branch
          %479 = sbr.rel (%p477) target = $region72
        $region71: #{tpu_custom_call.1} parent=67 // pred_region
          %s480 = sand.u32 %s40, 1
          %s481 = scalar_lea.sflag [#allocation4], %s480
          %s482 = sand.u32 %s40, 1
          %s483 = smul.addr %s482, 8
          %s484 = scalar_lea.vmem [#allocation3], %s483
          %s486 = ssub.s32 128, 128
          %487 = vsyncadd %s481, %s486
          %s488 = smul.addr %s30, 128
          %s489 = scalar_lea.hbm %s0, %s488
          %s491 = sshll.u32 %s484, 4
          %s492 = int_to_ptr.vmem [resolvable:$true] %s491
          %494 = dma.hbm_to_vmem [thread:$0]  %s489, 128, %s492, %s481
        $region72: #{tpu_custom_call.1} parent=67 // pred_fallthru
          _
      $region68: #{tpu_custom_call.1} parent=5 // pred_fallthru
        _
      %p495 = scmp.le.s32.totalorder 1, %s30
      %p496 = scmp.lt.s32.totalorder %s30, 3
      %p497 = pnand %p495, %p496
      %p498 = pneg %p497
      // Predicated region
      $region73: #{tpu_custom_call.1} parent=5 // pred_check
        _
      $region74: #{tpu_custom_call.1} parent=5 // pred_check_branch
        %500 = sbr.rel (%p497) target = $region76
      $region75: #{tpu_custom_call.1} parent=5 // pred_region
        %s501 = ssub.s32 %s30, 1
        %s502 = sand.u32 %s43, 1
        %s503 = scalar_lea.sflag [#allocation4], %s502
        %s504 = sand.u32 %s43, 1
        %s505 = smul.addr %s504, 8
        %s506 = scalar_lea.vmem [#allocation3], %s505
        // Predicated region
        $region77: #{tpu_custom_call.1} parent=75 // pred_check
          %p507 = pneg %p56
        $region78: #{tpu_custom_call.1} parent=75 // pred_check_branch
          %509 = sbr.rel (%p507) target = $region80
        $region79: #{tpu_custom_call.1} parent=75 // pred_region
          %510 = dma.done %s503, 128
        $region80: #{tpu_custom_call.1} parent=75 // pred_fallthru
          _
        // Predicated region
        $region81: #{tpu_custom_call.1} parent=75 // pred_check
          %p511 = pneg %p77
        $region82: #{tpu_custom_call.1} parent=75 // pred_check_branch
          %513 = sbr.rel (%p511) target = $region84
        $region83: #{tpu_custom_call.1} parent=75 // pred_region
          %514 = dma.done [#allocation7], 128
        $region84: #{tpu_custom_call.1} parent=75 // pred_fallthru
          _
        // Predicated region
        $region85: #{tpu_custom_call.1} parent=75 // pred_check
          %p515 = pneg %p98
        $region86: #{tpu_custom_call.1} parent=75 // pred_check_branch
          %517 = sbr.rel (%p515) target = $region88
        $region87: #{tpu_custom_call.1} parent=75 // pred_region
          %518 = dma.done [#allocation7], 16
        $region88: #{tpu_custom_call.1} parent=75 // pred_fallthru
          _
        // Predicated region
        $region89: #{tpu_custom_call.1} parent=75 // pred_check
          %p519 = pneg %p119
        $region90: #{tpu_custom_call.1} parent=75 // pred_check_branch
          %521 = sbr.rel (%p519) target = $region92
        $region91: #{tpu_custom_call.1} parent=75 // pred_region
          %522 = dma.done [#allocation10], 16
        $region92: #{tpu_custom_call.1} parent=75 // pred_fallthru
          _
        // Predicated region
        $region93: #{tpu_custom_call.1} parent=75 // pred_check
          %p523 = pneg %p140
        $region94: #{tpu_custom_call.1} parent=75 // pred_check_branch
          %525 = sbr.rel (%p523) target = $region96
        $region95: #{tpu_custom_call.1} parent=75 // pred_region
          %526 = dma.done [#allocation10], 3072
        $region96: #{tpu_custom_call.1} parent=75 // pred_fallthru
          _
        // Predicated region
        $region97: #{tpu_custom_call.1} parent=75 // pred_check
          %p527 = pneg %p182
        $region98: #{tpu_custom_call.1} parent=75 // pred_check_branch
          %529 = sbr.rel (%p527) target = $region100
        $region99: #{tpu_custom_call.1} parent=75 // pred_region
          %530 = dma.done [#allocation13], 1024
        $region100: #{tpu_custom_call.1} parent=75 // pred_fallthru
          _
        // Predicated region
        $region101: #{tpu_custom_call.1} parent=75 // pred_check
          %p531 = pneg %p266
        $region102: #{tpu_custom_call.1} parent=75 // pred_check_branch
          %533 = sbr.rel (%p531) target = $region104
        $region103: #{tpu_custom_call.1} parent=75 // pred_region
          %534 = dma.done [#allocation13], 4096
        $region104: #{tpu_custom_call.1} parent=75 // pred_fallthru
          _
        // Predicated region
        $region105: #{tpu_custom_call.1} parent=75 // pred_check
          %p535 = pneg %p308
        $region106: #{tpu_custom_call.1} parent=75 // pred_check_branch
          %537 = sbr.rel (%p535) target = $region108
        $region107: #{tpu_custom_call.1} parent=75 // pred_region
          %538 = dma.done [#allocation16], 4096
        $region108: #{tpu_custom_call.1} parent=75 // pred_fallthru
          _
        %s539 = sand.u32 %s43, 1
        %s540 = scalar_lea.sflag [#allocation4], %s539
        %s541 = sand.u32 %s43, 1
        %s542 = smul.addr %s541, 8
        %s543 = scalar_lea.vmem [#allocation3], %s542
        %p544 = pneg %p56
        %p545 = pneg %p53
        %p546 = pneg %p77
        %p547 = pneg %p74
        %p548 = pneg %p98
        %p549 = pneg %p95
        %p550 = pneg %p119
        %p551 = pneg %p116
        %p552 = pneg %p140
        %p553 = pneg %p137
        %p554 = pneg %p161
        %p555 = pneg %p158
        %p556 = pneg %p182
        %p557 = pneg %p179
        %p558 = pneg %p203
        %p559 = pneg %p200
        %p560 = pneg %p224
        %p561 = pneg %p221
        %p562 = pneg %p245
        %p563 = pneg %p242
        %p564 = pneg %p266
        %p565 = pneg %p263
        %p566 = pneg %p287
        %p567 = pneg %p284
        %p568 = pneg %p308
        %p569 = pneg %p305
        %p570 = pneg %p329
        %p571 = pneg %p326
        %p572 = pneg %p355
        %p573 = pneg %p352
        %s574 = sand.u32 %s342, 1
        %s575 = scalar_lea.sflag [#allocation5], %s574
        %s576 = sand.u32 %s342, 1
        %s577 = smul.addr %s576, 8
        %s578 = scalar_lea.vmem [#allocation17], %s577
        %v580 = vld [vmem:[%s506] sm:$0xff]
        %v581 = vld [vmem:[#allocation6] sm:$0xff]
        %v582 = vld [vmem:[#allocation8] sm:$0x1]
        %v583 = vld [vmem:[#allocation9] sm:$0x1]
        %584 = vadd.xlane.f32.xlu0 %v580
        %v585 = vpop.xlane.xlu0 %584
        %v586 = vrcp.pop 128.0
        %v587 = vmul.f32 %v585, %v586
        %v588 = vsub.f32 %v580, %v587
        %v589 = vmul.f32 %v588, %v588
        %590 = vadd.xlane.f32.xlu0 %v589
        %v591 = vpop.xlane.xlu0 %590
        %v592 = vmul.f32 %v591, %v586
        %v593 = vadd.f32 %v592, 1e-05
        %v594 = vrsqrt.pop %v593
        %v595 = vmul.f32 %v588, %v594
        %v597 = vlaneseq
        %v598 = vshrl.u32 %v597, 7
        %v599 = vsub.s32 0, %v598
        %v600 = vrot.slane %v582, %v599
        %v602 = vmul.f32 %v595, %v600
        %v604 = vlaneseq
        %v605 = vshrl.u32 %v604, 7
        %v606 = vsub.s32 0, %v605
        %v607 = vrot.slane %v583, %v606
        %v609 = vadd.f32 %v602, %v607
        %v610 = vpack.c.bf16 %v609, %v609
        %v611 = vld [vmem:[#allocation11] sm:$0xff]
        %v612 = vld [vmem:[#allocation11 + $0x8] sm:$0xf]
        %v613 = vld [vmem:[#allocation11 + $0xc] sm:$0xff]
        %v614 = vld [vmem:[#allocation11 + $0x14] sm:$0xf]
        %v615 = vld [vmem:[#allocation11 + $0x18] sm:$0xff]
        %v616 = vld [vmem:[#allocation11 + $0x20] sm:$0xf]
        %v617 = vld [vmem:[#allocation11 + $0x24] sm:$0xff]
        %v618 = vld [vmem:[#allocation11 + $0x2c] sm:$0xf]
        %v619 = vld [vmem:[#allocation11 + $0x30] sm:$0xff]
        %v620 = vld [vmem:[#allocation11 + $0x38] sm:$0xf]
        %v621 = vld [vmem:[#allocation11 + $0x3c] sm:$0xff]
        %v622 = vld [vmem:[#allocation11 + $0x44] sm:$0xf]
        %v623 = vld [vmem:[#allocation11 + $0x48] sm:$0xff]
        %v624 = vld [vmem:[#allocation11 + $0x50] sm:$0xf]
        %v625 = vld [vmem:[#allocation11 + $0x54] sm:$0xff]
        %v626 = vld [vmem:[#allocation11 + $0x5c] sm:$0xf]
        %v627 = vld [vmem:[#allocation11 + $0x60] sm:$0xff]
        %v628 = vld [vmem:[#allocation11 + $0x68] sm:$0xf]
        %v629 = vld [vmem:[#allocation11 + $0x6c] sm:$0xff]
        %v630 = vld [vmem:[#allocation11 + $0x74] sm:$0xf]
        %v631 = vld [vmem:[#allocation11 + $0x78] sm:$0xff]
        %v632 = vld [vmem:[#allocation11 + $0x80] sm:$0xf]
        %v633 = vld [vmem:[#allocation11 + $0x84] sm:$0xff]
        %v634 = vld [vmem:[#allocation11 + $0x8c] sm:$0xf]
        %v635 = vld [vmem:[#allocation11 + $0x90] sm:$0xff]
        %v636 = vld [vmem:[#allocation11 + $0x98] sm:$0xf]
        %v637 = vld [vmem:[#allocation11 + $0x9c] sm:$0xff]
        %v638 = vld [vmem:[#allocation11 + $0xa4] sm:$0xf]
        %v639 = vld [vmem:[#allocation11 + $0xa8] sm:$0xff]
        %v640 = vld [vmem:[#allocation11 + $0xb0] sm:$0xf]
        %v641 = vld [vmem:[#allocation11 + $0xb4] sm:$0xff]
        %v642 = vld [vmem:[#allocation11 + $0xbc] sm:$0xf]
        %v643 = vld [vmem:[%s5] sm:$0x7]
        %v645 = vlaneseq
        %v646 = vshrl.u32 %v645, 7
        %v647 = vsub.s32 0, %v646
        %v648 = vrot.slane %v643, %v647
        %v649 = vlaneseq
        %v650 = vshrl.u32 %v649, 7
        %v651 = vsub.s32 1, %v650
        %v652 = vrot.slane %v643, %v651
        %v653 = vlaneseq
        %v654 = vshrl.u32 %v653, 7
        %v655 = vsub.s32 2, %v654
        %v656 = vrot.slane %v643, %v655
        %v692 = vunpack.c.l.b16 %v611
        %v693 = vunpack.c.h.b16 %v611
        %v694 = vunpack.c.l.b16 %v612
        %v695 = vunpack.c.l.b16 %v613
        %v696 = vunpack.c.h.b16 %v613
        %v697 = vunpack.c.l.b16 %v614
        %v698 = vunpack.c.l.b16 %v615
        %v699 = vunpack.c.h.b16 %v615
        %v700 = vunpack.c.l.b16 %v616
        %v701 = vunpack.c.l.b16 %v617
        %v702 = vunpack.c.h.b16 %v617
        %v703 = vunpack.c.l.b16 %v618
        %v704 = vunpack.c.l.b16 %v619
        %v705 = vunpack.c.h.b16 %v619
        %v706 = vunpack.c.l.b16 %v620
        %v707 = vunpack.c.l.b16 %v621
        %v708 = vunpack.c.h.b16 %v621
        %v709 = vunpack.c.l.b16 %v622
        %v710 = vunpack.c.l.b16 %v623
        %v711 = vunpack.c.h.b16 %v623
        %v712 = vunpack.c.l.b16 %v624
        %v713 = vunpack.c.l.b16 %v625
        %v714 = vunpack.c.h.b16 %v625
        %v715 = vunpack.c.l.b16 %v626
        %v716 = vunpack.c.l.b16 %v627
        %v717 = vunpack.c.h.b16 %v627
        %v718 = vunpack.c.l.b16 %v628
        %v719 = vunpack.c.l.b16 %v629
        %v720 = vunpack.c.h.b16 %v629
        %v721 = vunpack.c.l.b16 %v630
        %v722 = vunpack.c.l.b16 %v631
        %v723 = vunpack.c.h.b16 %v631
        %v724 = vunpack.c.l.b16 %v632
        %v725 = vunpack.c.l.b16 %v633
        %v726 = vunpack.c.h.b16 %v633
        %v727 = vunpack.c.l.b16 %v634
        %v728 = vunpack.c.l.b16 %v635
        %v729 = vunpack.c.h.b16 %v635
        %v730 = vunpack.c.l.b16 %v636
        %v731 = vunpack.c.l.b16 %v637
        %v732 = vunpack.c.h.b16 %v637
        %v733 = vunpack.c.l.b16 %v638
        %v734 = vunpack.c.l.b16 %v639
        %v735 = vunpack.c.h.b16 %v639
        %v736 = vunpack.c.l.b16 %v640
        %v737 = vunpack.c.l.b16 %v641
        %v738 = vunpack.c.h.b16 %v641
        %v739 = vunpack.c.l.b16 %v642
        %v740 = vpack.c.b16 %v695, %v692
        %v741 = vpack.c.b16 %v696, %v693
        %v742 = vpack.c.b16 %v697, %v694
        %v743 = vpack.c.b16 %v701, %v698
        %v744 = vpack.c.b16 %v702, %v699
        %v745 = vpack.c.b16 %v703, %v700
        %v746 = vpack.c.b16 %v707, %v704
        %v747 = vpack.c.b16 %v708, %v705
        %v748 = vpack.c.b16 %v709, %v706
        %v749 = vpack.c.b16 %v713, %v710
        %v750 = vpack.c.b16 %v714, %v711
        %v751 = vpack.c.b16 %v715, %v712
        %v752 = vpack.c.b16 %v719, %v716
        %v753 = vpack.c.b16 %v720, %v717
        %v754 = vpack.c.b16 %v721, %v718
        %v755 = vpack.c.b16 %v725, %v722
        %v756 = vpack.c.b16 %v726, %v723
        %v757 = vpack.c.b16 %v727, %v724
        %v758 = vpack.c.b16 %v731, %v728
        %v759 = vpack.c.b16 %v732, %v729
        %v760 = vpack.c.b16 %v733, %v730
        %v761 = vpack.c.b16 %v737, %v734
        %v762 = vpack.c.b16 %v738, %v735
        %v763 = vpack.c.b16 %v739, %v736
        %788 = vmatprep.subr.bf16.mxu0 %v762
        %789 = vmatpush1.bf16.msra.mxu0 %v761
        %790 = vmatprep.subr.bf16.mxu0 %v759
        %791 = vmatpush1.bf16.msra.mxu0 %v758
        %792 = vmatprep.subr.bf16.mxu0 %v756
        %793 = vmatpush1.bf16.msra.mxu0 %v755
        %794 = vmatprep.subr.bf16.mxu0 %v753
        %795 = vmatpush1.bf16.msra.mxu0 %v752
        %796 = vmatprep.subr.bf16.mxu0 %v750
        %797 = vmatpush1.bf16.msra.mxu0 %v749
        %798 = vmatprep.subr.bf16.mxu0 %v747
        %799 = vmatpush1.bf16.msra.mxu0 %v746
        %800 = vmatprep.subr.bf16.mxu0 %v744
        %801 = vmatpush1.bf16.msra.mxu0 %v743
        %802 = vmatprep.subr.bf16.mxu0 %v741
        %803 = vmatpush1.bf16.msra.mxu0 %v740
        %804 = vmatprep.subr.bf16.mxu0 0
        %805 = vmatpush2.bf16.msra.mxu0 0
        %806 = vmatprep.subr.bf16.mxu0 0
        %807 = vmatpush2.bf16.msra.mxu0 0
        %808 = vmatprep.subr.bf16.mxu0 0
        %809 = vmatpush2.bf16.msra.mxu0 0
        %810 = vmatprep.subr.bf16.mxu0 0
        %811 = vmatpush2.bf16.msra.mxu0 0
        %812 = vmatprep.subr.bf16.mxu0 0
        %813 = vmatpush2.bf16.msra.mxu0 0
        %814 = vmatprep.subr.bf16.mxu0 0
        %815 = vmatpush2.bf16.msra.mxu0 0
        %816 = vmatprep.subr.bf16.mxu0 0
        %817 = vmatpush2.bf16.msra.mxu0 0
        %818 = vmatprep.subr.bf16.mxu0 0
        %819 = vmatpush2.bf16.msra.mxu0 0
        %820 = vmatprep.mubr.bf16.mxu0 0
        %821 = vmatmul.mubr.bf16.gmra.mxu0 %v610
        %v822 = vpop.f32.mrf.mxu0
        %v823 = vadd.f32 %v648, %v822
        %v824 = vpop.f32.mrf.mxu0
        %v825 = vadd.f32 %v652, %v824
        %v826 = vpop.f32.mrf.mxu0
        %v827 = vpop.f32.mrf.mxu0
        %828 = vdwg.mxu0
        %829 = vmatprep.subr.bf16.mxu0 0
        %830 = vmatpush1.bf16.msra.mxu0 %v763
        %831 = vmatprep.subr.bf16.mxu0 0
        %832 = vmatpush1.bf16.msra.mxu0 %v760
        %833 = vmatprep.subr.bf16.mxu0 0
        %834 = vmatpush1.bf16.msra.mxu0 %v757
        %835 = vmatprep.subr.bf16.mxu0 0
        %836 = vmatpush1.bf16.msra.mxu0 %v754
        %837 = vmatprep.subr.bf16.mxu0 0
        %838 = vmatpush1.bf16.msra.mxu0 %v751
        %839 = vmatprep.subr.bf16.mxu0 0
        %840 = vmatpush1.bf16.msra.mxu0 %v748
        %841 = vmatprep.subr.bf16.mxu0 0
        %842 = vmatpush1.bf16.msra.mxu0 %v745
        %843 = vmatprep.subr.bf16.mxu0 0
        %844 = vmatpush1.bf16.msra.mxu0 %v742
        %845 = vmatprep.subr.bf16.mxu0 0
        %846 = vmatpush2.bf16.msra.mxu0 0
        %847 = vmatprep.subr.bf16.mxu0 0
        %848 = vmatpush2.bf16.msra.mxu0 0
        %849 = vmatprep.subr.bf16.mxu0 0
        %850 = vmatpush2.bf16.msra.mxu0 0
        %851 = vmatprep.subr.bf16.mxu0 0
        %852 = vmatpush2.bf16.msra.mxu0 0
        %853 = vmatprep.subr.bf16.mxu0 0
        %854 = vmatpush2.bf16.msra.mxu0 0
        %855 = vmatprep.subr.bf16.mxu0 0
        %856 = vmatpush2.bf16.msra.mxu0 0
        %857 = vmatprep.subr.bf16.mxu0 0
        %858 = vmatpush2.bf16.msra.mxu0 0
        %859 = vmatprep.subr.bf16.mxu0 0
        %860 = vmatpush2.bf16.msra.mxu0 0
        %861 = vmatprep.mubr.bf16.mxu0 0
        %862 = vmatmul.mubr.bf16.gmra.mxu0 %v610
        %v863 = vpop.f32.mrf.mxu0
        %v864 = vadd.f32 %v656, %v863
        %v865 = vpop.f32.mrf.mxu0
        %v866 = vpop.f32.mrf.mxu0
        %v867 = vpop.f32.mrf.mxu0
        %868 = vdwg.mxu0
        %v869 = vpack.c.bf16 %v823, %v823
        %v870 = vpack.c.bf16 %v825, %v825
        %v871 = vpack.c.bf16 %v864, %v864
        %vm872 = vcmask 261120
        %v874 = vsel %vm872, %v869, 0
        %v877 = vsel %vm872, %v870, 0
        %879 = vmatprep.subr.bf16.mxu0 0
        %880 = vmatpush1.bf16.xpose.msra.mxu0 0
        %881 = vmatprep.subr.bf16.mxu0 0
        %882 = vmatpush1.bf16.xpose.msra.mxu0 0
        %883 = vmatprep.subr.bf16.mxu0 0
        %884 = vmatpush1.bf16.xpose.msra.mxu0 0
        %885 = vmatprep.subr.bf16.mxu0 0
        %886 = vmatpush1.bf16.xpose.msra.mxu0 0
        %887 = vmatprep.subr.bf16.mxu0 0
        %888 = vmatpush1.bf16.xpose.msra.mxu0 0
        %889 = vmatprep.subr.bf16.mxu0 0
        %890 = vmatpush1.bf16.xpose.msra.mxu0 0
        %891 = vmatprep.subr.bf16.mxu0 0
        %892 = vmatpush1.bf16.xpose.msra.mxu0 0
        %893 = vmatprep.subr.bf16.mxu0 0
        %894 = vmatpush1.bf16.xpose.msra.mxu0 %v877
        %895 = vmatprep.subr.bf16.mxu0 0
        %896 = vmatpush2.bf16.xpose.msra.mxu0 0
        %897 = vmatprep.subr.bf16.mxu0 0
        %898 = vmatpush2.bf16.xpose.msra.mxu0 0
        %899 = vmatprep.subr.bf16.mxu0 0
        %900 = vmatpush2.bf16.xpose.msra.mxu0 0
        %901 = vmatprep.subr.bf16.mxu0 0
        %902 = vmatpush2.bf16.xpose.msra.mxu0 0
        %903 = vmatprep.subr.bf16.mxu0 0
        %904 = vmatpush2.bf16.xpose.msra.mxu0 0
        %905 = vmatprep.subr.bf16.mxu0 0
        %906 = vmatpush2.bf16.xpose.msra.mxu0 0
        %907 = vmatprep.subr.bf16.mxu0 0
        %908 = vmatpush2.bf16.xpose.msra.mxu0 0
        %909 = vmatprep.subr.bf16.mxu0 0
        %910 = vmatpush2.bf16.xpose.msra.mxu0 0
        %911 = vmatprep.mubr.bf16.mxu0 0
        %912 = vmatmul.mubr.bf16.gmra.mxu0 %v874
        %v913 = vpop.f32.mrf.mxu0
        %v914 = vadd.f32 0.0, %v913
        %v915 = vpop.f32.mrf.mxu0
        %v916 = vpop.f32.mrf.mxu0
        %v917 = vpop.f32.mrf.mxu0
        %918 = vdwg.mxu0
        %v919 = vmul.f32 %v914, 0.17677669
        %v920 = vadd.f32 %v919, %v581
        %vm921 = vcmask 64512
        %v922 = vsel %vm921, %v920, -inf
        %923 = vmax.xlane.f32.xlu0 %v922
        %v924 = vpop.xlane.xlu0 %923
        %v925 = vsub.f32 %v920, %v924
        %v926 = vmul.f32 %v925, 1.442695
        %v927 = vpow.pop %v926
        %v928 = vsel %vm921, %v927, 0.0
        %929 = vadd.xlane.f32.xlu0 %v928
        %v930 = vpop.xlane.xlu0 %929
        %v931 = vrcp.pop %v930
        %v932 = vmul.f32 %v927, %v931
        %v933 = vpack.c.bf16 %v932, %v932
        %v935 = vsel %vm921, %v933, 0
        %vm937 = vcmask 1043456
        %v939 = vsel %vm937, %v871, 0
        %941 = vmatprep.subr.bf16.mxu0 0
        %942 = vmatpush1.bf16.msra.mxu0 0
        %943 = vmatprep.subr.bf16.mxu0 0
        %944 = vmatpush1.bf16.msra.mxu0 0
        %945 = vmatprep.subr.bf16.mxu0 0
        %946 = vmatpush1.bf16.msra.mxu0 0
        %947 = vmatprep.subr.bf16.mxu0 0
        %948 = vmatpush1.bf16.msra.mxu0 0
        %949 = vmatprep.subr.bf16.mxu0 0
        %950 = vmatpush1.bf16.msra.mxu0 0
        %951 = vmatprep.subr.bf16.mxu0 0
        %952 = vmatpush1.bf16.msra.mxu0 0
        %953 = vmatprep.subr.bf16.mxu0 0
        %954 = vmatpush1.bf16.msra.mxu0 0
        %955 = vmatprep.subr.bf16.mxu0 0
        %956 = vmatpush1.bf16.msra.mxu0 %v939
        %957 = vmatprep.subr.bf16.mxu0 0
        %958 = vmatpush2.bf16.msra.mxu0 0
        %959 = vmatprep.subr.bf16.mxu0 0
        %960 = vmatpush2.bf16.msra.mxu0 0
        %961 = vmatprep.subr.bf16.mxu0 0
        %962 = vmatpush2.bf16.msra.mxu0 0
        %963 = vmatprep.subr.bf16.mxu0 0
        %964 = vmatpush2.bf16.msra.mxu0 0
        %965 = vmatprep.subr.bf16.mxu0 0
        %966 = vmatpush2.bf16.msra.mxu0 0
        %967 = vmatprep.subr.bf16.mxu0 0
        %968 = vmatpush2.bf16.msra.mxu0 0
        %969 = vmatprep.subr.bf16.mxu0 0
        %970 = vmatpush2.bf16.msra.mxu0 0
        %971 = vmatprep.subr.bf16.mxu0 0
        %972 = vmatpush2.bf16.msra.mxu0 0
        %973 = vmatprep.mubr.bf16.mxu0 0
        %974 = vmatmul.mubr.bf16.gmra.mxu0 %v935
        %v975 = vpop.f32.mrf.mxu0
        %v976 = vadd.f32 0.0, %v975
        %v977 = vpop.f32.mrf.mxu0
        %v978 = vpop.f32.mrf.mxu0
        %v979 = vpop.f32.mrf.mxu0
        %980 = vdwg.mxu0
        %981 = vst.msk [vmem:[#allocation2] sm:$0xff] %vm872, %v976
        %983 = vrot.lane.b32.xlu0 %v869, 96
        %v984 = vpop.permute.xlu0 %983
        %986 = vrot.lane.b32.xlu0 %v870, 96
        %v987 = vpop.permute.xlu0 %986
        %v989 = vsel %vm872, %v984, 0
        %v992 = vsel %vm872, %v987, 0
        %994 = vmatprep.subr.bf16.mxu0 0
        %995 = vmatpush1.bf16.xpose.msra.mxu0 0
        %996 = vmatprep.subr.bf16.mxu0 0
        %997 = vmatpush1.bf16.xpose.msra.mxu0 0
        %998 = vmatprep.subr.bf16.mxu0 0
        %999 = vmatpush1.bf16.xpose.msra.mxu0 0
        %1000 = vmatprep.subr.bf16.mxu0 0
        %1001 = vmatpush1.bf16.xpose.msra.mxu0 0
        %1002 = vmatprep.subr.bf16.mxu0 0
        %1003 = vmatpush1.bf16.xpose.msra.mxu0 0
        %1004 = vmatprep.subr.bf16.mxu0 0
        %1005 = vmatpush1.bf16.xpose.msra.mxu0 0
        %1006 = vmatprep.subr.bf16.mxu0 0
        %1007 = vmatpush1.bf16.xpose.msra.mxu0 0
        %1008 = vmatprep.subr.bf16.mxu0 0
        %1009 = vmatpush1.bf16.xpose.msra.mxu0 %v992
        %1010 = vmatprep.subr.bf16.mxu0 0
        %1011 = vmatpush2.bf16.xpose.msra.mxu0 0
        %1012 = vmatprep.subr.bf16.mxu0 0
        %1013 = vmatpush2.bf16.xpose.msra.mxu0 0
        %1014 = vmatprep.subr.bf16.mxu0 0
        %1015 = vmatpush2.bf16.xpose.msra.mxu0 0
        %1016 = vmatprep.subr.bf16.mxu0 0
        %1017 = vmatpush2.bf16.xpose.msra.mxu0 0
        %1018 = vmatprep.subr.bf16.mxu0 0
        %1019 = vmatpush2.bf16.xpose.msra.mxu0 0
        %1020 = vmatprep.subr.bf16.mxu0 0
        %1021 = vmatpush2.bf16.xpose.msra.mxu0 0
        %1022 = vmatprep.subr.bf16.mxu0 0
        %1023 = vmatpush2.bf16.xpose.msra.mxu0 0
        %1024 = vmatprep.subr.bf16.mxu0 0
        %1025 = vmatpush2.bf16.xpose.msra.mxu0 0
        %1026 = vmatprep.mubr.bf16.mxu0 0
        %1027 = vmatmul.mubr.bf16.gmra.mxu0 %v989
        %v1028 = vpop.f32.mrf.mxu0
        %v1029 = vadd.f32 0.0, %v1028
        %v1030 = vpop.f32.mrf.mxu0
        %v1031 = vpop.f32.mrf.mxu0
        %v1032 = vpop.f32.mrf.mxu0
        %1033 = vdwg.mxu0
        %v1034 = vmul.f32 %v1029, 0.17677669
        %v1035 = vadd.f32 %v1034, %v581
        %v1036 = vsel %vm921, %v1035, -inf
        %1037 = vmax.xlane.f32.xlu0 %v1036
        %v1038 = vpop.xlane.xlu0 %1037
        %v1039 = vsub.f32 %v1035, %v1038
        %v1040 = vmul.f32 %v1039, 1.442695
        %v1041 = vpow.pop %v1040
        %v1042 = vsel %vm921, %v1041, 0.0
        %1043 = vadd.xlane.f32.xlu0 %v1042
        %v1044 = vpop.xlane.xlu0 %1043
        %v1045 = vrcp.pop %v1044
        %v1046 = vmul.f32 %v1041, %v1045
        %v1047 = vpack.c.bf16 %v1046, %v1046
        %1049 = vrot.lane.b32.xlu0 %v871, 96
        %v1050 = vpop.permute.xlu0 %1049
        %v1052 = vsel %vm921, %v1047, 0
        %v1055 = vsel %vm937, %v1050, 0
        %1057 = vmatprep.subr.bf16.mxu0 0
        %1058 = vmatpush1.bf16.msra.mxu0 0
        %1059 = vmatprep.subr.bf16.mxu0 0
        %1060 = vmatpush1.bf16.msra.mxu0 0
        %1061 = vmatprep.subr.bf16.mxu0 0
        %1062 = vmatpush1.bf16.msra.mxu0 0
        %1063 = vmatprep.subr.bf16.mxu0 0
        %1064 = vmatpush1.bf16.msra.mxu0 0
        %1065 = vmatprep.subr.bf16.mxu0 0
        %1066 = vmatpush1.bf16.msra.mxu0 0
        %1067 = vmatprep.subr.bf16.mxu0 0
        %1068 = vmatpush1.bf16.msra.mxu0 0
        %1069 = vmatprep.subr.bf16.mxu0 0
        %1070 = vmatpush1.bf16.msra.mxu0 0
        %1071 = vmatprep.subr.bf16.mxu0 0
        %1072 = vmatpush1.bf16.msra.mxu0 %v1055
        %1073 = vmatprep.subr.bf16.mxu0 0
        %1074 = vmatpush2.bf16.msra.mxu0 0
        %1075 = vmatprep.subr.bf16.mxu0 0
        %1076 = vmatpush2.bf16.msra.mxu0 0
        %1077 = vmatprep.subr.bf16.mxu0 0
        %1078 = vmatpush2.bf16.msra.mxu0 0
        %1079 = vmatprep.subr.bf16.mxu0 0
        %1080 = vmatpush2.bf16.msra.mxu0 0
        %1081 = vmatprep.subr.bf16.mxu0 0
        %1082 = vmatpush2.bf16.msra.mxu0 0
        %1083 = vmatprep.subr.bf16.mxu0 0
        %1084 = vmatpush2.bf16.msra.mxu0 0
        %1085 = vmatprep.subr.bf16.mxu0 0
        %1086 = vmatpush2.bf16.msra.mxu0 0
        %1087 = vmatprep.subr.bf16.mxu0 0
        %1088 = vmatpush2.bf16.msra.mxu0 0
        %1089 = vmatprep.mubr.bf16.mxu0 0
        %1090 = vmatmul.mubr.bf16.gmra.mxu0 %v1052
        %v1091 = vpop.f32.mrf.mxu0
        %v1092 = vadd.f32 0.0, %v1091
        %v1093 = vpop.f32.mrf.mxu0
        %v1094 = vpop.f32.mrf.mxu0
        %v1095 = vpop.f32.mrf.mxu0
        %1096 = vdwg.mxu0
        %1098 = vrot.lane.b32.xlu0 %v1092, 32
        %v1099 = vpop.permute.xlu0 %1098
        %vm1101 = vcmask 523520
        %1102 = vst.msk [vmem:[#allocation2] sm:$0xff] %vm1101, %v1099
        %1103 = vrot.lane.b32.xlu0 %v869, 64
        %v1104 = vpop.permute.xlu0 %1103
        %1105 = vrot.lane.b32.xlu0 %v870, 64
        %v1106 = vpop.permute.xlu0 %1105
        %v1108 = vsel %vm872, %v1104, 0
        %v1111 = vsel %vm872, %v1106, 0
        %1113 = vmatprep.subr.bf16.mxu0 0
        %1114 = vmatpush1.bf16.xpose.msra.mxu0 0
        %1115 = vmatprep.subr.bf16.mxu0 0
        %1116 = vmatpush1.bf16.xpose.msra.mxu0 0
        %1117 = vmatprep.subr.bf16.mxu0 0
        %1118 = vmatpush1.bf16.xpose.msra.mxu0 0
        %1119 = vmatprep.subr.bf16.mxu0 0
        %1120 = vmatpush1.bf16.xpose.msra.mxu0 0
        %1121 = vmatprep.subr.bf16.mxu0 0
        %1122 = vmatpush1.bf16.xpose.msra.mxu0 0
        %1123 = vmatprep.subr.bf16.mxu0 0
        %1124 = vmatpush1.bf16.xpose.msra.mxu0 0
        %1125 = vmatprep.subr.bf16.mxu0 0
        %1126 = vmatpush1.bf16.xpose.msra.mxu0 0
        %1127 = vmatprep.subr.bf16.mxu0 0
        %1128 = vmatpush1.bf16.xpose.msra.mxu0 %v1111
        %1129 = vmatprep.subr.bf16.mxu0 0
        %1130 = vmatpush2.bf16.xpose.msra.mxu0 0
        %1131 = vmatprep.subr.bf16.mxu0 0
        %1132 = vmatpush2.bf16.xpose.msra.mxu0 0
        %1133 = vmatprep.subr.bf16.mxu0 0
        %1134 = vmatpush2.bf16.xpose.msra.mxu0 0
        %1135 = vmatprep.subr.bf16.mxu0 0
        %1136 = vmatpush2.bf16.xpose.msra.mxu0 0
        %1137 = vmatprep.subr.bf16.mxu0 0
        %1138 = vmatpush2.bf16.xpose.msra.mxu0 0
        %1139 = vmatprep.subr.bf16.mxu0 0
        %1140 = vmatpush2.bf16.xpose.msra.mxu0 0
        %1141 = vmatprep.subr.bf16.mxu0 0
        %1142 = vmatpush2.bf16.xpose.msra.mxu0 0
        %1143 = vmatprep.subr.bf16.mxu0 0
        %1144 = vmatpush2.bf16.xpose.msra.mxu0 0
        %1145 = vmatprep.mubr.bf16.mxu0 0
        %1146 = vmatmul.mubr.bf16.gmra.mxu0 %v1108
        %v1147 = vpop.f32.mrf.mxu0
        %v1148 = vadd.f32 0.0, %v1147
        %v1149 = vpop.f32.mrf.mxu0
        %v1150 = vpop.f32.mrf.mxu0
        %v1151 = vpop.f32.mrf.mxu0
        %1152 = vdwg.mxu0
        %v1153 = vmul.f32 %v1148, 0.17677669
        %v1154 = vadd.f32 %v1153, %v581
        %v1155 = vsel %vm921, %v1154, -inf
        %1156 = vmax.xlane.f32.xlu0 %v1155
        %v1157 = vpop.xlane.xlu0 %1156
        %v1158 = vsub.f32 %v1154, %v1157
        %v1159 = vmul.f32 %v1158, 1.442695
        %v1160 = vpow.pop %v1159
        %v1161 = vsel %vm921, %v1160, 0.0
        %1162 = vadd.xlane.f32.xlu0 %v1161
        %v1163 = vpop.xlane.xlu0 %1162
        %v1164 = vrcp.pop %v1163
        %v1165 = vmul.f32 %v1160, %v1164
        %v1166 = vpack.c.bf16 %v1165, %v1165
        %1167 = vrot.lane.b32.xlu0 %v871, 64
        %v1168 = vpop.permute.xlu0 %1167
        %v1170 = vsel %vm921, %v1166, 0
        %v1173 = vsel %vm937, %v1168, 0
        %1175 = vmatprep.subr.bf16.mxu0 0
        %1176 = vmatpush1.bf16.msra.mxu0 0
        %1177 = vmatprep.subr.bf16.mxu0 0
        %1178 = vmatpush1.bf16.msra.mxu0 0
        %1179 = vmatprep.subr.bf16.mxu0 0
        %1180 = vmatpush1.bf16.msra.mxu0 0
        %1181 = vmatprep.subr.bf16.mxu0 0
        %1182 = vmatpush1.bf16.msra.mxu0 0
        %1183 = vmatprep.subr.bf16.mxu0 0
        %1184 = vmatpush1.bf16.msra.mxu0 0
        %1185 = vmatprep.subr.bf16.mxu0 0
        %1186 = vmatpush1.bf16.msra.mxu0 0
        %1187 = vmatprep.subr.bf16.mxu0 0
        %1188 = vmatpush1.bf16.msra.mxu0 0
        %1189 = vmatprep.subr.bf16.mxu0 0
        %1190 = vmatpush1.bf16.msra.mxu0 %v1173
        %1191 = vmatprep.subr.bf16.mxu0 0
        %1192 = vmatpush2.bf16.msra.mxu0 0
        %1193 = vmatprep.subr.bf16.mxu0 0
        %1194 = vmatpush2.bf16.msra.mxu0 0
        %1195 = vmatprep.subr.bf16.mxu0 0
        %1196 = vmatpush2.bf16.msra.mxu0 0
        %1197 = vmatprep.subr.bf16.mxu0 0
        %1198 = vmatpush2.bf16.msra.mxu0 0
        %1199 = vmatprep.subr.bf16.mxu0 0
        %1200 = vmatpush2.bf16.msra.mxu0 0
        %1201 = vmatprep.subr.bf16.mxu0 0
        %1202 = vmatpush2.bf16.msra.mxu0 0
        %1203 = vmatprep.subr.bf16.mxu0 0
        %1204 = vmatpush2.bf16.msra.mxu0 0
        %1205 = vmatprep.subr.bf16.mxu0 0
        %1206 = vmatpush2.bf16.msra.mxu0 0
        %1207 = vmatprep.mubr.bf16.mxu0 0
        %1208 = vmatmul.mubr.bf16.gmra.mxu0 %v1170
        %v1209 = vpop.f32.mrf.mxu0
        %v1210 = vadd.f32 0.0, %v1209
        %v1211 = vpop.f32.mrf.mxu0
        %v1212 = vpop.f32.mrf.mxu0
        %v1213 = vpop.f32.mrf.mxu0
        %1214 = vdwg.mxu0
        %1216 = vrot.lane.b32.xlu0 %v1210, 64
        %v1217 = vpop.permute.xlu0 %1216
        %vm1219 = vcmask 785920
        %1220 = vst.msk [vmem:[#allocation2] sm:$0xff] %vm1219, %v1217
        %1221 = vrot.lane.b32.xlu0 %v869, 32
        %v1222 = vpop.permute.xlu0 %1221
        %1223 = vrot.lane.b32.xlu0 %v870, 32
        %v1224 = vpop.permute.xlu0 %1223
        %v1226 = vsel %vm872, %v1222, 0
        %v1229 = vsel %vm872, %v1224, 0
        %1231 = vmatprep.subr.bf16.mxu0 0
        %1232 = vmatpush1.bf16.xpose.msra.mxu0 0
        %1233 = vmatprep.subr.bf16.mxu0 0
        %1234 = vmatpush1.bf16.xpose.msra.mxu0 0
        %1235 = vmatprep.subr.bf16.mxu0 0
        %1236 = vmatpush1.bf16.xpose.msra.mxu0 0
        %1237 = vmatprep.subr.bf16.mxu0 0
        %1238 = vmatpush1.bf16.xpose.msra.mxu0 0
        %1239 = vmatprep.subr.bf16.mxu0 0
        %1240 = vmatpush1.bf16.xpose.msra.mxu0 0
        %1241 = vmatprep.subr.bf16.mxu0 0
        %1242 = vmatpush1.bf16.xpose.msra.mxu0 0
        %1243 = vmatprep.subr.bf16.mxu0 0
        %1244 = vmatpush1.bf16.xpose.msra.mxu0 0
        %1245 = vmatprep.subr.bf16.mxu0 0
        %1246 = vmatpush1.bf16.xpose.msra.mxu0 %v1229
        %1247 = vmatprep.subr.bf16.mxu0 0
        %1248 = vmatpush2.bf16.xpose.msra.mxu0 0
        %1249 = vmatprep.subr.bf16.mxu0 0
        %1250 = vmatpush2.bf16.xpose.msra.mxu0 0
        %1251 = vmatprep.subr.bf16.mxu0 0
        %1252 = vmatpush2.bf16.xpose.msra.mxu0 0
        %1253 = vmatprep.subr.bf16.mxu0 0
        %1254 = vmatpush2.bf16.xpose.msra.mxu0 0
        %1255 = vmatprep.subr.bf16.mxu0 0
        %1256 = vmatpush2.bf16.xpose.msra.mxu0 0
        %1257 = vmatprep.subr.bf16.mxu0 0
        %1258 = vmatpush2.bf16.xpose.msra.mxu0 0
        %1259 = vmatprep.subr.bf16.mxu0 0
        %1260 = vmatpush2.bf16.xpose.msra.mxu0 0
        %1261 = vmatprep.subr.bf16.mxu0 0
        %1262 = vmatpush2.bf16.xpose.msra.mxu0 0
        %1263 = vmatprep.mubr.bf16.mxu0 0
        %1264 = vmatmul.mubr.bf16.gmra.mxu0 %v1226
        %v1265 = vpop.f32.mrf.mxu0
        %v1266 = vadd.f32 0.0, %v1265
        %v1267 = vpop.f32.mrf.mxu0
        %v1268 = vpop.f32.mrf.mxu0
        %v1269 = vpop.f32.mrf.mxu0
        %1270 = vdwg.mxu0
        %v1271 = vmul.f32 %v1266, 0.17677669
        %v1272 = vadd.f32 %v1271, %v581
        %v1273 = vsel %vm921, %v1272, -inf
        %1274 = vmax.xlane.f32.xlu0 %v1273
        %v1275 = vpop.xlane.xlu0 %1274
        %v1276 = vsub.f32 %v1272, %v1275
        %v1277 = vmul.f32 %v1276, 1.442695
        %v1278 = vpow.pop %v1277
        %v1279 = vsel %vm921, %v1278, 0.0
        %1280 = vadd.xlane.f32.xlu0 %v1279
        %v1281 = vpop.xlane.xlu0 %1280
        %v1282 = vrcp.pop %v1281
        %v1283 = vmul.f32 %v1278, %v1282
        %v1284 = vpack.c.bf16 %v1283, %v1283
        %1285 = vrot.lane.b32.xlu0 %v871, 32
        %v1286 = vpop.permute.xlu0 %1285
        %v1288 = vsel %vm921, %v1284, 0
        %v1291 = vsel %vm937, %v1286, 0
        %1293 = vmatprep.subr.bf16.mxu0 0
        %1294 = vmatpush1.bf16.msra.mxu0 0
        %1295 = vmatprep.subr.bf16.mxu0 0
        %1296 = vmatpush1.bf16.msra.mxu0 0
        %1297 = vmatprep.subr.bf16.mxu0 0
        %1298 = vmatpush1.bf16.msra.mxu0 0
        %1299 = vmatprep.subr.bf16.mxu0 0
        %1300 = vmatpush1.bf16.msra.mxu0 0
        %1301 = vmatprep.subr.bf16.mxu0 0
        %1302 = vmatpush1.bf16.msra.mxu0 0
        %1303 = vmatprep.subr.bf16.mxu0 0
        %1304 = vmatpush1.bf16.msra.mxu0 0
        %1305 = vmatprep.subr.bf16.mxu0 0
        %1306 = vmatpush1.bf16.msra.mxu0 0
        %1307 = vmatprep.subr.bf16.mxu0 0
        %1308 = vmatpush1.bf16.msra.mxu0 %v1291
        %1309 = vmatprep.subr.bf16.mxu0 0
        %1310 = vmatpush2.bf16.msra.mxu0 0
        %1311 = vmatprep.subr.bf16.mxu0 0
        %1312 = vmatpush2.bf16.msra.mxu0 0
        %1313 = vmatprep.subr.bf16.mxu0 0
        %1314 = vmatpush2.bf16.msra.mxu0 0
        %1315 = vmatprep.subr.bf16.mxu0 0
        %1316 = vmatpush2.bf16.msra.mxu0 0
        %1317 = vmatprep.subr.bf16.mxu0 0
        %1318 = vmatpush2.bf16.msra.mxu0 0
        %1319 = vmatprep.subr.bf16.mxu0 0
        %1320 = vmatpush2.bf16.msra.mxu0 0
        %1321 = vmatprep.subr.bf16.mxu0 0
        %1322 = vmatpush2.bf16.msra.mxu0 0
        %1323 = vmatprep.subr.bf16.mxu0 0
        %1324 = vmatpush2.bf16.msra.mxu0 0
        %1325 = vmatprep.mubr.bf16.mxu0 0
        %1326 = vmatmul.mubr.bf16.gmra.mxu0 %v1288
        %v1327 = vpop.f32.mrf.mxu0
        %v1328 = vadd.f32 0.0, %v1327
        %v1329 = vpop.f32.mrf.mxu0
        %v1330 = vpop.f32.mrf.mxu0
        %v1331 = vpop.f32.mrf.mxu0
        %1332 = vdwg.mxu0
        %1334 = vrot.lane.b32.xlu0 %v1328, 96
        %v1335 = vpop.permute.xlu0 %1334
        %vm1337 = vcmask 1048320
        %1338 = vst.msk [vmem:[#allocation2] sm:$0xff] %vm1337, %v1335
        %v1339 = vld [vmem:[#allocation2] sm:$0xff]
        %v1340 = vpack.c.bf16 %v1339, %v1339
        %v1341 = vld [vmem:[#allocation12] sm:$0xf]
        %v1342 = vld [vmem:[#allocation12 + $0x4] sm:$0xf]
        %v1343 = vld [vmem:[#allocation12 + $0x8] sm:$0xf]
        %v1344 = vld [vmem:[#allocation12 + $0xc] sm:$0xf]
        %v1345 = vld [vmem:[#allocation12 + $0x10] sm:$0xf]
        %v1346 = vld [vmem:[#allocation12 + $0x14] sm:$0xf]
        %v1347 = vld [vmem:[#allocation12 + $0x18] sm:$0xf]
        %v1348 = vld [vmem:[#allocation12 + $0x1c] sm:$0xf]
        %v1349 = vld [vmem:[#allocation12 + $0x20] sm:$0xf]
        %v1350 = vld [vmem:[#allocation12 + $0x24] sm:$0xf]
        %v1351 = vld [vmem:[#allocation12 + $0x28] sm:$0xf]
        %v1352 = vld [vmem:[#allocation12 + $0x2c] sm:$0xf]
        %v1353 = vld [vmem:[#allocation12 + $0x30] sm:$0xf]
        %v1354 = vld [vmem:[#allocation12 + $0x34] sm:$0xf]
        %v1355 = vld [vmem:[#allocation12 + $0x38] sm:$0xf]
        %v1356 = vld [vmem:[#allocation12 + $0x3c] sm:$0xf]
        %v1357 = vld [vmem:[%s7] sm:$0x1]
        %v1359 = vlaneseq
        %v1360 = vshrl.u32 %v1359, 7
        %v1361 = vsub.s32 0, %v1360
        %v1362 = vrot.slane %v1357, %v1361
        %v1380 = vunpack.c.l.b16 %v1341
        %v1381 = vunpack.c.l.b16 %v1342
        %v1382 = vunpack.c.l.b16 %v1343
        %v1383 = vunpack.c.l.b16 %v1344
        %v1384 = vunpack.c.l.b16 %v1345
        %v1385 = vunpack.c.l.b16 %v1346
        %v1386 = vunpack.c.l.b16 %v1347
        %v1387 = vunpack.c.l.b16 %v1348
        %v1388 = vunpack.c.l.b16 %v1349
        %v1389 = vunpack.c.l.b16 %v1350
        %v1390 = vunpack.c.l.b16 %v1351
        %v1391 = vunpack.c.l.b16 %v1352
        %v1392 = vunpack.c.l.b16 %v1353
        %v1393 = vunpack.c.l.b16 %v1354
        %v1394 = vunpack.c.l.b16 %v1355
        %v1395 = vunpack.c.l.b16 %v1356
        %v1396 = vpack.c.b16 %v1381, %v1380
        %v1397 = vpack.c.b16 %v1383, %v1382
        %v1398 = vpack.c.b16 %v1385, %v1384
        %v1399 = vpack.c.b16 %v1387, %v1386
        %v1400 = vpack.c.b16 %v1389, %v1388
        %v1401 = vpack.c.b16 %v1391, %v1390
        %v1402 = vpack.c.b16 %v1393, %v1392
        %v1403 = vpack.c.b16 %v1395, %v1394
        %1412 = vmatprep.subr.bf16.mxu0 0
        %1413 = vmatpush1.bf16.msra.mxu0 %v1403
        %1414 = vmatprep.subr.bf16.mxu0 0
        %1415 = vmatpush1.bf16.msra.mxu0 %v1402
        %1416 = vmatprep.subr.bf16.mxu0 0
        %1417 = vmatpush1.bf16.msra.mxu0 %v1401
        %1418 = vmatprep.subr.bf16.mxu0 0
        %1419 = vmatpush1.bf16.msra.mxu0 %v1400
        %1420 = vmatprep.subr.bf16.mxu0 0
        %1421 = vmatpush1.bf16.msra.mxu0 %v1399
        %1422 = vmatprep.subr.bf16.mxu0 0
        %1423 = vmatpush1.bf16.msra.mxu0 %v1398
        %1424 = vmatprep.subr.bf16.mxu0 0
        %1425 = vmatpush1.bf16.msra.mxu0 %v1397
        %1426 = vmatprep.subr.bf16.mxu0 0
        %1427 = vmatpush1.bf16.msra.mxu0 %v1396
        %1428 = vmatprep.subr.bf16.mxu0 0
        %1429 = vmatpush2.bf16.msra.mxu0 0
        %1430 = vmatprep.subr.bf16.mxu0 0
        %1431 = vmatpush2.bf16.msra.mxu0 0
        %1432 = vmatprep.subr.bf16.mxu0 0
        %1433 = vmatpush2.bf16.msra.mxu0 0
        %1434 = vmatprep.subr.bf16.mxu0 0
        %1435 = vmatpush2.bf16.msra.mxu0 0
        %1436 = vmatprep.subr.bf16.mxu0 0
        %1437 = vmatpush2.bf16.msra.mxu0 0
        %1438 = vmatprep.subr.bf16.mxu0 0
        %1439 = vmatpush2.bf16.msra.mxu0 0
        %1440 = vmatprep.subr.bf16.mxu0 0
        %1441 = vmatpush2.bf16.msra.mxu0 0
        %1442 = vmatprep.subr.bf16.mxu0 0
        %1443 = vmatpush2.bf16.msra.mxu0 0
        %1444 = vmatprep.mubr.bf16.mxu0 0
        %1445 = vmatmul.mubr.bf16.gmra.mxu0 %v1340
        %v1446 = vpop.f32.mrf.mxu0
        %v1447 = vadd.f32 %v1362, %v1446
        %v1448 = vpop.f32.mrf.mxu0
        %v1449 = vpop.f32.mrf.mxu0
        %v1450 = vpop.f32.mrf.mxu0
        %1451 = vdwg.mxu0
        %v1452 = vadd.f32 %v580, %v1447
        %v1453 = vld [vmem:[%s8] sm:$0x1]
        %v1454 = vld [vmem:[%s9] sm:$0x1]
        %1455 = vadd.xlane.f32.xlu0 %v1452
        %v1456 = vpop.xlane.xlu0 %1455
        %v1457 = vmul.f32 %v1456, %v586
        %v1458 = vsub.f32 %v1452, %v1457
        %v1459 = vmul.f32 %v1458, %v1458
        %1460 = vadd.xlane.f32.xlu0 %v1459
        %v1461 = vpop.xlane.xlu0 %1460
        %v1462 = vmul.f32 %v1461, %v586
        %v1463 = vadd.f32 %v1462, 1e-05
        %v1464 = vrsqrt.pop %v1463
        %v1465 = vmul.f32 %v1458, %v1464
        %v1467 = vlaneseq
        %v1468 = vshrl.u32 %v1467, 7
        %v1469 = vsub.s32 0, %v1468
        %v1470 = vrot.slane %v1453, %v1469
        %v1472 = vmul.f32 %v1465, %v1470
        %v1474 = vlaneseq
        %v1475 = vshrl.u32 %v1474, 7
        %v1476 = vsub.s32 0, %v1475
        %v1477 = vrot.slane %v1454, %v1476
        %v1479 = vadd.f32 %v1472, %v1477
        %v1480 = vpack.c.bf16 %v1479, %v1479
        %v1481 = vld [vmem:[#allocation14] sm:$0xff]
        %v1482 = vld [vmem:[#allocation14 + $0x8] sm:$0xff]
        %v1483 = vld [vmem:[#allocation14 + $0x10] sm:$0xff]
        %v1484 = vld [vmem:[#allocation14 + $0x18] sm:$0xff]
        %v1485 = vld [vmem:[#allocation14 + $0x20] sm:$0xff]
        %v1486 = vld [vmem:[#allocation14 + $0x28] sm:$0xff]
        %v1487 = vld [vmem:[#allocation14 + $0x30] sm:$0xff]
        %v1488 = vld [vmem:[#allocation14 + $0x38] sm:$0xff]
        %v1489 = vld [vmem:[#allocation14 + $0x40] sm:$0xff]
        %v1490 = vld [vmem:[#allocation14 + $0x48] sm:$0xff]
        %v1491 = vld [vmem:[#allocation14 + $0x50] sm:$0xff]
        %v1492 = vld [vmem:[#allocation14 + $0x58] sm:$0xff]
        %v1493 = vld [vmem:[#allocation14 + $0x60] sm:$0xff]
        %v1494 = vld [vmem:[#allocation14 + $0x68] sm:$0xff]
        %v1495 = vld [vmem:[#allocation14 + $0x70] sm:$0xff]
        %v1496 = vld [vmem:[#allocation14 + $0x78] sm:$0xff]
        %v1497 = vld [vmem:[#allocation14 + $0x80] sm:$0xff]
        %v1498 = vld [vmem:[#allocation14 + $0x88] sm:$0xff]
        %v1499 = vld [vmem:[#allocation14 + $0x90] sm:$0xff]
        %v1500 = vld [vmem:[#allocation14 + $0x98] sm:$0xff]
        %v1501 = vld [vmem:[#allocation14 + $0xa0] sm:$0xff]
        %v1502 = vld [vmem:[#allocation14 + $0xa8] sm:$0xff]
        %v1503 = vld [vmem:[#allocation14 + $0xb0] sm:$0xff]
        %v1504 = vld [vmem:[#allocation14 + $0xb8] sm:$0xff]
        %v1505 = vld [vmem:[#allocation14 + $0xc0] sm:$0xff]
        %v1506 = vld [vmem:[#allocation14 + $0xc8] sm:$0xff]
        %v1507 = vld [vmem:[#allocation14 + $0xd0] sm:$0xff]
        %v1508 = vld [vmem:[#allocation14 + $0xd8] sm:$0xff]
        %v1509 = vld [vmem:[#allocation14 + $0xe0] sm:$0xff]
        %v1510 = vld [vmem:[#allocation14 + $0xe8] sm:$0xff]
        %v1511 = vld [vmem:[#allocation14 + $0xf0] sm:$0xff]
        %v1512 = vld [vmem:[#allocation14 + $0xf8] sm:$0xff]
        %v1513 = vld [vmem:[%s11] sm:$0xf]
        %v1515 = vlaneseq
        %v1516 = vshrl.u32 %v1515, 7
        %v1517 = vsub.s32 0, %v1516
        %v1518 = vrot.slane %v1513, %v1517
        %v1519 = vlaneseq
        %v1520 = vshrl.u32 %v1519, 7
        %v1521 = vsub.s32 1, %v1520
        %v1522 = vrot.slane %v1513, %v1521
        %v1523 = vlaneseq
        %v1524 = vshrl.u32 %v1523, 7
        %v1525 = vsub.s32 2, %v1524
        %v1526 = vrot.slane %v1513, %v1525
        %v1527 = vlaneseq
        %v1528 = vshrl.u32 %v1527, 7
        %v1529 = vsub.s32 3, %v1528
        %v1530 = vrot.slane %v1513, %v1529
        %v1567 = vunpack.c.l.b16 %v1481
        %v1568 = vunpack.c.h.b16 %v1481
        %v1569 = vunpack.c.l.b16 %v1482
        %v1570 = vunpack.c.h.b16 %v1482
        %v1571 = vunpack.c.l.b16 %v1483
        %v1572 = vunpack.c.h.b16 %v1483
        %v1573 = vunpack.c.l.b16 %v1484
        %v1574 = vunpack.c.h.b16 %v1484
        %v1575 = vunpack.c.l.b16 %v1485
        %v1576 = vunpack.c.h.b16 %v1485
        %v1577 = vunpack.c.l.b16 %v1486
        %v1578 = vunpack.c.h.b16 %v1486
        %v1579 = vunpack.c.l.b16 %v1487
        %v1580 = vunpack.c.h.b16 %v1487
        %v1581 = vunpack.c.l.b16 %v1488
        %v1582 = vunpack.c.h.b16 %v1488
        %v1583 = vunpack.c.l.b16 %v1489
        %v1584 = vunpack.c.h.b16 %v1489
        %v1585 = vunpack.c.l.b16 %v1490
        %v1586 = vunpack.c.h.b16 %v1490
        %v1587 = vunpack.c.l.b16 %v1491
        %v1588 = vunpack.c.h.b16 %v1491
        %v1589 = vunpack.c.l.b16 %v1492
        %v1590 = vunpack.c.h.b16 %v1492
        %v1591 = vunpack.c.l.b16 %v1493
        %v1592 = vunpack.c.h.b16 %v1493
        %v1593 = vunpack.c.l.b16 %v1494
        %v1594 = vunpack.c.h.b16 %v1494
        %v1595 = vunpack.c.l.b16 %v1495
        %v1596 = vunpack.c.h.b16 %v1495
        %v1597 = vunpack.c.l.b16 %v1496
        %v1598 = vunpack.c.h.b16 %v1496
        %v1599 = vunpack.c.l.b16 %v1497
        %v1600 = vunpack.c.h.b16 %v1497
        %v1601 = vunpack.c.l.b16 %v1498
        %v1602 = vunpack.c.h.b16 %v1498
        %v1603 = vunpack.c.l.b16 %v1499
        %v1604 = vunpack.c.h.b16 %v1499
        %v1605 = vunpack.c.l.b16 %v1500
        %v1606 = vunpack.c.h.b16 %v1500
        %v1607 = vunpack.c.l.b16 %v1501
        %v1608 = vunpack.c.h.b16 %v1501
        %v1609 = vunpack.c.l.b16 %v1502
        %v1610 = vunpack.c.h.b16 %v1502
        %v1611 = vunpack.c.l.b16 %v1503
        %v1612 = vunpack.c.h.b16 %v1503
        %v1613 = vunpack.c.l.b16 %v1504
        %v1614 = vunpack.c.h.b16 %v1504
        %v1615 = vunpack.c.l.b16 %v1505
        %v1616 = vunpack.c.h.b16 %v1505
        %v1617 = vunpack.c.l.b16 %v1506
        %v1618 = vunpack.c.h.b16 %v1506
        %v1619 = vunpack.c.l.b16 %v1507
        %v1620 = vunpack.c.h.b16 %v1507
        %v1621 = vunpack.c.l.b16 %v1508
        %v1622 = vunpack.c.h.b16 %v1508
        %v1623 = vunpack.c.l.b16 %v1509
        %v1624 = vunpack.c.h.b16 %v1509
        %v1625 = vunpack.c.l.b16 %v1510
        %v1626 = vunpack.c.h.b16 %v1510
        %v1627 = vunpack.c.l.b16 %v1511
        %v1628 = vunpack.c.h.b16 %v1511
        %v1629 = vunpack.c.l.b16 %v1512
        %v1630 = vunpack.c.h.b16 %v1512
        %v1631 = vpack.c.b16 %v1571, %v1567
        %v1632 = vpack.c.b16 %v1572, %v1568
        %v1633 = vpack.c.b16 %v1573, %v1569
        %v1634 = vpack.c.b16 %v1574, %v1570
        %v1635 = vpack.c.b16 %v1579, %v1575
        %v1636 = vpack.c.b16 %v1580, %v1576
        %v1637 = vpack.c.b16 %v1581, %v1577
        %v1638 = vpack.c.b16 %v1582, %v1578
        %v1639 = vpack.c.b16 %v1587, %v1583
        %v1640 = vpack.c.b16 %v1588, %v1584
        %v1641 = vpack.c.b16 %v1589, %v1585
        %v1642 = vpack.c.b16 %v1590, %v1586
        %v1643 = vpack.c.b16 %v1595, %v1591
        %v1644 = vpack.c.b16 %v1596, %v1592
        %v1645 = vpack.c.b16 %v1597, %v1593
        %v1646 = vpack.c.b16 %v1598, %v1594
        %v1647 = vpack.c.b16 %v1603, %v1599
        %v1648 = vpack.c.b16 %v1604, %v1600
        %v1649 = vpack.c.b16 %v1605, %v1601
        %v1650 = vpack.c.b16 %v1606, %v1602
        %v1651 = vpack.c.b16 %v1611, %v1607
        %v1652 = vpack.c.b16 %v1612, %v1608
        %v1653 = vpack.c.b16 %v1613, %v1609
        %v1654 = vpack.c.b16 %v1614, %v1610
        %v1655 = vpack.c.b16 %v1619, %v1615
        %v1656 = vpack.c.b16 %v1620, %v1616
        %v1657 = vpack.c.b16 %v1621, %v1617
        %v1658 = vpack.c.b16 %v1622, %v1618
        %v1659 = vpack.c.b16 %v1627, %v1623
        %v1660 = vpack.c.b16 %v1628, %v1624
        %v1661 = vpack.c.b16 %v1629, %v1625
        %v1662 = vpack.c.b16 %v1630, %v1626
        %1695 = vmatprep.subr.bf16.mxu0 %v1660
        %1696 = vmatpush1.bf16.msra.mxu0 %v1659
        %1697 = vmatprep.subr.bf16.mxu0 %v1656
        %1698 = vmatpush1.bf16.msra.mxu0 %v1655
        %1699 = vmatprep.subr.bf16.mxu0 %v1652
        %1700 = vmatpush1.bf16.msra.mxu0 %v1651
        %1701 = vmatprep.subr.bf16.mxu0 %v1648
        %1702 = vmatpush1.bf16.msra.mxu0 %v1647
        %1703 = vmatprep.subr.bf16.mxu0 %v1644
        %1704 = vmatpush1.bf16.msra.mxu0 %v1643
        %1705 = vmatprep.subr.bf16.mxu0 %v1640
        %1706 = vmatpush1.bf16.msra.mxu0 %v1639
        %1707 = vmatprep.subr.bf16.mxu0 %v1636
        %1708 = vmatpush1.bf16.msra.mxu0 %v1635
        %1709 = vmatprep.subr.bf16.mxu0 %v1632
        %1710 = vmatpush1.bf16.msra.mxu0 %v1631
        %1711 = vmatprep.subr.bf16.mxu0 0
        %1712 = vmatpush2.bf16.msra.mxu0 0
        %1713 = vmatprep.subr.bf16.mxu0 0
        %1714 = vmatpush2.bf16.msra.mxu0 0
        %1715 = vmatprep.subr.bf16.mxu0 0
        %1716 = vmatpush2.bf16.msra.mxu0 0
        %1717 = vmatprep.subr.bf16.mxu0 0
        %1718 = vmatpush2.bf16.msra.mxu0 0
        %1719 = vmatprep.subr.bf16.mxu0 0
        %1720 = vmatpush2.bf16.msra.mxu0 0
        %1721 = vmatprep.subr.bf16.mxu0 0
        %1722 = vmatpush2.bf16.msra.mxu0 0
        %1723 = vmatprep.subr.bf16.mxu0 0
        %1724 = vmatpush2.bf16.msra.mxu0 0
        %1725 = vmatprep.subr.bf16.mxu0 0
        %1726 = vmatpush2.bf16.msra.mxu0 0
        %1727 = vmatprep.mubr.bf16.mxu0 0
        %1728 = vmatmul.mubr.bf16.gmra.mxu0 %v1480
        %v1729 = vpop.f32.mrf.mxu0
        %v1730 = vadd.f32 %v1518, %v1729
        %v1731 = vpop.f32.mrf.mxu0
        %v1732 = vadd.f32 %v1522, %v1731
        %v1733 = vpop.f32.mrf.mxu0
        %v1734 = vpop.f32.mrf.mxu0
        %1735 = vdwg.mxu0
        %1736 = vmatprep.subr.bf16.mxu0 %v1662
        %1737 = vmatpush1.bf16.msra.mxu0 %v1661
        %1738 = vmatprep.subr.bf16.mxu0 %v1658
        %1739 = vmatpush1.bf16.msra.mxu0 %v1657
        %1740 = vmatprep.subr.bf16.mxu0 %v1654
        %1741 = vmatpush1.bf16.msra.mxu0 %v1653
        %1742 = vmatprep.subr.bf16.mxu0 %v1650
        %1743 = vmatpush1.bf16.msra.mxu0 %v1649
        %1744 = vmatprep.subr.bf16.mxu0 %v1646
        %1745 = vmatpush1.bf16.msra.mxu0 %v1645
        %1746 = vmatprep.subr.bf16.mxu0 %v1642
        %1747 = vmatpush1.bf16.msra.mxu0 %v1641
        %1748 = vmatprep.subr.bf16.mxu0 %v1638
        %1749 = vmatpush1.bf16.msra.mxu0 %v1637
        %1750 = vmatprep.subr.bf16.mxu0 %v1634
        %1751 = vmatpush1.bf16.msra.mxu0 %v1633
        %1752 = vmatprep.subr.bf16.mxu0 0
        %1753 = vmatpush2.bf16.msra.mxu0 0
        %1754 = vmatprep.subr.bf16.mxu0 0
        %1755 = vmatpush2.bf16.msra.mxu0 0
        %1756 = vmatprep.subr.bf16.mxu0 0
        %1757 = vmatpush2.bf16.msra.mxu0 0
        %1758 = vmatprep.subr.bf16.mxu0 0
        %1759 = vmatpush2.bf16.msra.mxu0 0
        %1760 = vmatprep.subr.bf16.mxu0 0
        %1761 = vmatpush2.bf16.msra.mxu0 0
        %1762 = vmatprep.subr.bf16.mxu0 0
        %1763 = vmatpush2.bf16.msra.mxu0 0
        %1764 = vmatprep.subr.bf16.mxu0 0
        %1765 = vmatpush2.bf16.msra.mxu0 0
        %1766 = vmatprep.subr.bf16.mxu0 0
        %1767 = vmatpush2.bf16.msra.mxu0 0
        %1768 = vmatprep.mubr.bf16.mxu0 0
        %1769 = vmatmul.mubr.bf16.gmra.mxu0 %v1480
        %v1770 = vpop.f32.mrf.mxu0
        %v1771 = vadd.f32 %v1526, %v1770
        %v1772 = vpop.f32.mrf.mxu0
        %v1773 = vadd.f32 %v1530, %v1772
        %v1774 = vpop.f32.mrf.mxu0
        %v1775 = vpop.f32.mrf.mxu0
        %1776 = vdwg.mxu0
        %v1777 = vmul.f32 %v1730, 0.5
        %v1778 = vmul.f32 %v1732, 0.5
        %v1779 = vmul.f32 %v1771, 0.5
        %v1780 = vmul.f32 %v1773, 0.5
        %v1781 = vmul.f32 %v1730, 0.70710677
        %v1782 = vmul.f32 %v1732, 0.70710677
        %v1783 = vmul.f32 %v1771, 0.70710677
        %v1784 = vmul.f32 %v1773, 0.70710677
        %v1785 = verf.f32.pop %v1781
        %v1786 = verf.f32.pop %v1782
        %v1787 = verf.f32.pop %v1783
        %v1788 = verf.f32.pop %v1784
        %v1789 = vadd.f32 %v1785, 1.0
        %v1790 = vadd.f32 %v1786, 1.0
        %v1791 = vadd.f32 %v1787, 1.0
        %v1792 = vadd.f32 %v1788, 1.0
        %v1793 = vmul.f32 %v1777, %v1789
        %v1794 = vmul.f32 %v1778, %v1790
        %v1795 = vmul.f32 %v1779, %v1791
        %v1796 = vmul.f32 %v1780, %v1792
        %v1797 = vpack.c.bf16 %v1793, %v1793
        %v1798 = vpack.c.bf16 %v1794, %v1794
        %v1799 = vpack.c.bf16 %v1795, %v1795
        %v1800 = vpack.c.bf16 %v1796, %v1796
        %v1801 = vld [vmem:[#allocation15] sm:$0xf]
        %v1802 = vld [vmem:[#allocation15 + $0x4] sm:$0xf]
        %v1803 = vld [vmem:[#allocation15 + $0x8] sm:$0xf]
        %v1804 = vld [vmem:[#allocation15 + $0xc] sm:$0xf]
        %v1805 = vld [vmem:[#allocation15 + $0x10] sm:$0xf]
        %v1806 = vld [vmem:[#allocation15 + $0x14] sm:$0xf]
        %v1807 = vld [vmem:[#allocation15 + $0x18] sm:$0xf]
        %v1808 = vld [vmem:[#allocation15 + $0x1c] sm:$0xf]
        %v1809 = vld [vmem:[#allocation15 + $0x20] sm:$0xf]
        %v1810 = vld [vmem:[#allocation15 + $0x24] sm:$0xf]
        %v1811 = vld [vmem:[#allocation15 + $0x28] sm:$0xf]
        %v1812 = vld [vmem:[#allocation15 + $0x2c] sm:$0xf]
        %v1813 = vld [vmem:[#allocation15 + $0x30] sm:$0xf]
        %v1814 = vld [vmem:[#allocation15 + $0x34] sm:$0xf]
        %v1815 = vld [vmem:[#allocation15 + $0x38] sm:$0xf]
        %v1816 = vld [vmem:[#allocation15 + $0x3c] sm:$0xf]
        %v1817 = vld [vmem:[#allocation15 + $0x40] sm:$0xf]
        %v1818 = vld [vmem:[#allocation15 + $0x44] sm:$0xf]
        %v1819 = vld [vmem:[#allocation15 + $0x48] sm:$0xf]
        %v1820 = vld [vmem:[#allocation15 + $0x4c] sm:$0xf]
        %v1821 = vld [vmem:[#allocation15 + $0x50] sm:$0xf]
        %v1822 = vld [vmem:[#allocation15 + $0x54] sm:$0xf]
        %v1823 = vld [vmem:[#allocation15 + $0x58] sm:$0xf]
        %v1824 = vld [vmem:[#allocation15 + $0x5c] sm:$0xf]
        %v1825 = vld [vmem:[#allocation15 + $0x60] sm:$0xf]
        %v1826 = vld [vmem:[#allocation15 + $0x64] sm:$0xf]
        %v1827 = vld [vmem:[#allocation15 + $0x68] sm:$0xf]
        %v1828 = vld [vmem:[#allocation15 + $0x6c] sm:$0xf]
        %v1829 = vld [vmem:[#allocation15 + $0x70] sm:$0xf]
        %v1830 = vld [vmem:[#allocation15 + $0x74] sm:$0xf]
        %v1831 = vld [vmem:[#allocation15 + $0x78] sm:$0xf]
        %v1832 = vld [vmem:[#allocation15 + $0x7c] sm:$0xf]
        %v1833 = vld [vmem:[#allocation15 + $0x80] sm:$0xf]
        %v1834 = vld [vmem:[#allocation15 + $0x84] sm:$0xf]
        %v1835 = vld [vmem:[#allocation15 + $0x88] sm:$0xf]
        %v1836 = vld [vmem:[#allocation15 + $0x8c] sm:$0xf]
        %v1837 = vld [vmem:[#allocation15 + $0x90] sm:$0xf]
        %v1838 = vld [vmem:[#allocation15 + $0x94] sm:$0xf]
        %v1839 = vld [vmem:[#allocation15 + $0x98] sm:$0xf]
        %v1840 = vld [vmem:[#allocation15 + $0x9c] sm:$0xf]
        %v1841 = vld [vmem:[#allocation15 + $0xa0] sm:$0xf]
        %v1842 = vld [vmem:[#allocation15 + $0xa4] sm:$0xf]
        %v1843 = vld [vmem:[#allocation15 + $0xa8] sm:$0xf]
        %v1844 = vld [vmem:[#allocation15 + $0xac] sm:$0xf]
        %v1845 = vld [vmem:[#allocation15 + $0xb0] sm:$0xf]
        %v1846 = vld [vmem:[#allocation15 + $0xb4] sm:$0xf]
        %v1847 = vld [vmem:[#allocation15 + $0xb8] sm:$0xf]
        %v1848 = vld [vmem:[#allocation15 + $0xbc] sm:$0xf]
        %v1849 = vld [vmem:[#allocation15 + $0xc0] sm:$0xf]
        %v1850 = vld [vmem:[#allocation15 + $0xc4] sm:$0xf]
        %v1851 = vld [vmem:[#allocation15 + $0xc8] sm:$0xf]
        %v1852 = vld [vmem:[#allocation15 + $0xcc] sm:$0xf]
        %v1853 = vld [vmem:[#allocation15 + $0xd0] sm:$0xf]
        %v1854 = vld [vmem:[#allocation15 + $0xd4] sm:$0xf]
        %v1855 = vld [vmem:[#allocation15 + $0xd8] sm:$0xf]
        %v1856 = vld [vmem:[#allocation15 + $0xdc] sm:$0xf]
        %v1857 = vld [vmem:[#allocation15 + $0xe0] sm:$0xf]
        %v1858 = vld [vmem:[#allocation15 + $0xe4] sm:$0xf]
        %v1859 = vld [vmem:[#allocation15 + $0xe8] sm:$0xf]
        %v1860 = vld [vmem:[#allocation15 + $0xec] sm:$0xf]
        %v1861 = vld [vmem:[#allocation15 + $0xf0] sm:$0xf]
        %v1862 = vld [vmem:[#allocation15 + $0xf4] sm:$0xf]
        %v1863 = vld [vmem:[#allocation15 + $0xf8] sm:$0xf]
        %v1864 = vld [vmem:[#allocation15 + $0xfc] sm:$0xf]
        %v1865 = vld [vmem:[%s13] sm:$0x1]
        %v1867 = vlaneseq
        %v1868 = vshrl.u32 %v1867, 7
        %v1869 = vsub.s32 0, %v1868
        %v1870 = vrot.slane %v1865, %v1869
        %v1936 = vunpack.c.l.b16 %v1801
        %v1937 = vunpack.c.l.b16 %v1802
        %v1938 = vunpack.c.l.b16 %v1803
        %v1939 = vunpack.c.l.b16 %v1804
        %v1940 = vunpack.c.l.b16 %v1805
        %v1941 = vunpack.c.l.b16 %v1806
        %v1942 = vunpack.c.l.b16 %v1807
        %v1943 = vunpack.c.l.b16 %v1808
        %v1944 = vunpack.c.l.b16 %v1809
        %v1945 = vunpack.c.l.b16 %v1810
        %v1946 = vunpack.c.l.b16 %v1811
        %v1947 = vunpack.c.l.b16 %v1812
        %v1948 = vunpack.c.l.b16 %v1813
        %v1949 = vunpack.c.l.b16 %v1814
        %v1950 = vunpack.c.l.b16 %v1815
        %v1951 = vunpack.c.l.b16 %v1816
        %v1952 = vunpack.c.l.b16 %v1817
        %v1953 = vunpack.c.l.b16 %v1818
        %v1954 = vunpack.c.l.b16 %v1819
        %v1955 = vunpack.c.l.b16 %v1820
        %v1956 = vunpack.c.l.b16 %v1821
        %v1957 = vunpack.c.l.b16 %v1822
        %v1958 = vunpack.c.l.b16 %v1823
        %v1959 = vunpack.c.l.b16 %v1824
        %v1960 = vunpack.c.l.b16 %v1825
        %v1961 = vunpack.c.l.b16 %v1826
        %v1962 = vunpack.c.l.b16 %v1827
        %v1963 = vunpack.c.l.b16 %v1828
        %v1964 = vunpack.c.l.b16 %v1829
        %v1965 = vunpack.c.l.b16 %v1830
        %v1966 = vunpack.c.l.b16 %v1831
        %v1967 = vunpack.c.l.b16 %v1832
        %v1968 = vunpack.c.l.b16 %v1833
        %v1969 = vunpack.c.l.b16 %v1834
        %v1970 = vunpack.c.l.b16 %v1835
        %v1971 = vunpack.c.l.b16 %v1836
        %v1972 = vunpack.c.l.b16 %v1837
        %v1973 = vunpack.c.l.b16 %v1838
        %v1974 = vunpack.c.l.b16 %v1839
        %v1975 = vunpack.c.l.b16 %v1840
        %v1976 = vunpack.c.l.b16 %v1841
        %v1977 = vunpack.c.l.b16 %v1842
        %v1978 = vunpack.c.l.b16 %v1843
        %v1979 = vunpack.c.l.b16 %v1844
        %v1980 = vunpack.c.l.b16 %v1845
        %v1981 = vunpack.c.l.b16 %v1846
        %v1982 = vunpack.c.l.b16 %v1847
        %v1983 = vunpack.c.l.b16 %v1848
        %v1984 = vunpack.c.l.b16 %v1849
        %v1985 = vunpack.c.l.b16 %v1850
        %v1986 = vunpack.c.l.b16 %v1851
        %v1987 = vunpack.c.l.b16 %v1852
        %v1988 = vunpack.c.l.b16 %v1853
        %v1989 = vunpack.c.l.b16 %v1854
        %v1990 = vunpack.c.l.b16 %v1855
        %v1991 = vunpack.c.l.b16 %v1856
        %v1992 = vunpack.c.l.b16 %v1857
        %v1993 = vunpack.c.l.b16 %v1858
        %v1994 = vunpack.c.l.b16 %v1859
        %v1995 = vunpack.c.l.b16 %v1860
        %v1996 = vunpack.c.l.b16 %v1861
        %v1997 = vunpack.c.l.b16 %v1862
        %v1998 = vunpack.c.l.b16 %v1863
        %v1999 = vunpack.c.l.b16 %v1864
        %v2000 = vpack.c.b16 %v1937, %v1936
        %v2001 = vpack.c.b16 %v1939, %v1938
        %v2002 = vpack.c.b16 %v1941, %v1940
        %v2003 = vpack.c.b16 %v1943, %v1942
        %v2004 = vpack.c.b16 %v1945, %v1944
        %v2005 = vpack.c.b16 %v1947, %v1946
        %v2006 = vpack.c.b16 %v1949, %v1948
        %v2007 = vpack.c.b16 %v1951, %v1950
        %v2008 = vpack.c.b16 %v1953, %v1952
        %v2009 = vpack.c.b16 %v1955, %v1954
        %v2010 = vpack.c.b16 %v1957, %v1956
        %v2011 = vpack.c.b16 %v1959, %v1958
        %v2012 = vpack.c.b16 %v1961, %v1960
        %v2013 = vpack.c.b16 %v1963, %v1962
        %v2014 = vpack.c.b16 %v1965, %v1964
        %v2015 = vpack.c.b16 %v1967, %v1966
        %v2016 = vpack.c.b16 %v1969, %v1968
        %v2017 = vpack.c.b16 %v1971, %v1970
        %v2018 = vpack.c.b16 %v1973, %v1972
        %v2019 = vpack.c.b16 %v1975, %v1974
        %v2020 = vpack.c.b16 %v1977, %v1976
        %v2021 = vpack.c.b16 %v1979, %v1978
        %v2022 = vpack.c.b16 %v1981, %v1980
        %v2023 = vpack.c.b16 %v1983, %v1982
        %v2024 = vpack.c.b16 %v1985, %v1984
        %v2025 = vpack.c.b16 %v1987, %v1986
        %v2026 = vpack.c.b16 %v1989, %v1988
        %v2027 = vpack.c.b16 %v1991, %v1990
        %v2028 = vpack.c.b16 %v1993, %v1992
        %v2029 = vpack.c.b16 %v1995, %v1994
        %v2030 = vpack.c.b16 %v1997, %v1996
        %v2031 = vpack.c.b16 %v1999, %v1998
        %2064 = vmatprep.subr.bf16.mxu0 0
        %2065 = vmatpush1.bf16.msra.mxu0 %v2007
        %2066 = vmatprep.subr.bf16.mxu0 0
        %2067 = vmatpush1.bf16.msra.mxu0 %v2006
        %2068 = vmatprep.subr.bf16.mxu0 0
        %2069 = vmatpush1.bf16.msra.mxu0 %v2005
        %2070 = vmatprep.subr.bf16.mxu0 0
        %2071 = vmatpush1.bf16.msra.mxu0 %v2004
        %2072 = vmatprep.subr.bf16.mxu0 0
        %2073 = vmatpush1.bf16.msra.mxu0 %v2003
        %2074 = vmatprep.subr.bf16.mxu0 0
        %2075 = vmatpush1.bf16.msra.mxu0 %v2002
        %2076 = vmatprep.subr.bf16.mxu0 0
        %2077 = vmatpush1.bf16.msra.mxu0 %v2001
        %2078 = vmatprep.subr.bf16.mxu0 0
        %2079 = vmatpush1.bf16.msra.mxu0 %v2000
        %2080 = vmatprep.subr.bf16.mxu0 0
        %2081 = vmatpush2.bf16.msra.mxu0 %v2015
        %2082 = vmatprep.subr.bf16.mxu0 0
        %2083 = vmatpush2.bf16.msra.mxu0 %v2014
        %2084 = vmatprep.subr.bf16.mxu0 0
        %2085 = vmatpush2.bf16.msra.mxu0 %v2013
        %2086 = vmatprep.subr.bf16.mxu0 0
        %2087 = vmatpush2.bf16.msra.mxu0 %v2012
        %2088 = vmatprep.subr.bf16.mxu0 0
        %2089 = vmatpush2.bf16.msra.mxu0 %v2011
        %2090 = vmatprep.subr.bf16.mxu0 0
        %2091 = vmatpush2.bf16.msra.mxu0 %v2010
        %2092 = vmatprep.subr.bf16.mxu0 0
        %2093 = vmatpush2.bf16.msra.mxu0 %v2009
        %2094 = vmatprep.subr.bf16.mxu0 0
        %2095 = vmatpush2.bf16.msra.mxu0 %v2008
        %2096 = vmatprep.mubr.bf16.mxu0 %v1798
        %2097 = vmatmul.mubr.bf16.gmra.mxu0 %v1797
        %v2098 = vpop.f32.mrf.mxu0
        %v2099 = vadd.f32 %v1870, %v2098
        %v2100 = vpop.f32.mrf.mxu0
        %v2101 = vpop.f32.mrf.mxu0
        %v2102 = vpop.f32.mrf.mxu0
        %2103 = vdwg.mxu0
        %2104 = vmatprep.subr.bf16.mxu0 0
        %2105 = vmatpush1.bf16.msra.mxu0 %v2023
        %2106 = vmatprep.subr.bf16.mxu0 0
        %2107 = vmatpush1.bf16.msra.mxu0 %v2022
        %2108 = vmatprep.subr.bf16.mxu0 0
        %2109 = vmatpush1.bf16.msra.mxu0 %v2021
        %2110 = vmatprep.subr.bf16.mxu0 0
        %2111 = vmatpush1.bf16.msra.mxu0 %v2020
        %2112 = vmatprep.subr.bf16.mxu0 0
        %2113 = vmatpush1.bf16.msra.mxu0 %v2019
        %2114 = vmatprep.subr.bf16.mxu0 0
        %2115 = vmatpush1.bf16.msra.mxu0 %v2018
        %2116 = vmatprep.subr.bf16.mxu0 0
        %2117 = vmatpush1.bf16.msra.mxu0 %v2017
        %2118 = vmatprep.subr.bf16.mxu0 0
        %2119 = vmatpush1.bf16.msra.mxu0 %v2016
        %2120 = vmatprep.subr.bf16.mxu0 0
        %2121 = vmatpush2.bf16.msra.mxu0 %v2031
        %2122 = vmatprep.subr.bf16.mxu0 0
        %2123 = vmatpush2.bf16.msra.mxu0 %v2030
        %2124 = vmatprep.subr.bf16.mxu0 0
        %2125 = vmatpush2.bf16.msra.mxu0 %v2029
        %2126 = vmatprep.subr.bf16.mxu0 0
        %2127 = vmatpush2.bf16.msra.mxu0 %v2028
        %2128 = vmatprep.subr.bf16.mxu0 0
        %2129 = vmatpush2.bf16.msra.mxu0 %v2027
        %2130 = vmatprep.subr.bf16.mxu0 0
        %2131 = vmatpush2.bf16.msra.mxu0 %v2026
        %2132 = vmatprep.subr.bf16.mxu0 0
        %2133 = vmatpush2.bf16.msra.mxu0 %v2025
        %2134 = vmatprep.subr.bf16.mxu0 0
        %2135 = vmatpush2.bf16.msra.mxu0 %v2024
        %2136 = vmatprep.mubr.bf16.mxu0 %v1800
        %2137 = vmatmul.mubr.bf16.gmra.mxu0 %v1799
        %v2138 = vpop.f32.mrf.mxu0
        %v2139 = vadd.f32 %v2099, %v2138
        %v2140 = vpop.f32.mrf.mxu0
        %v2141 = vpop.f32.mrf.mxu0
        %v2142 = vpop.f32.mrf.mxu0
        %2143 = vdwg.mxu0
        %v2144 = vadd.f32 %v1452, %v2139
        %2145 = vst [vmem:[%s578] sm:$0xff] %v2144
        %s2146 = sand.u32 %s342, 1
        %s2147 = scalar_lea.sflag [#allocation5], %s2146
        %s2148 = sand.u32 %s342, 1
        %s2149 = smul.addr %s2148, 8
        %s2150 = scalar_lea.vmem [#allocation17], %s2149
        // Predicated region
        $region109: #{tpu_custom_call.1} parent=75 // pred_check
          %p2151 = pneg %p352
        $region110: #{tpu_custom_call.1} parent=75 // pred_check_branch
          %2153 = sbr.rel (%p2151) target = $region112
        $region111: #{tpu_custom_call.1} parent=75 // pred_region
          %s2155 = ssub.s32 128, 128
          %2156 = vsyncadd %s2147, %s2155
          %s2157 = smul.addr %s35, 128
          %s2158 = scalar_lea.hbm %s14, %s2157
          %s2160 = sshll.u32 %s2150, 4
          %s2161 = int_to_ptr.vmem [resolvable:$true] %s2160
          %2163 = dma.vmem_to_hbm [thread:$0]  %s2161, 128, %s2158, %s2147
        $region112: #{tpu_custom_call.1} parent=75 // pred_fallthru
          _
      $region76: #{tpu_custom_call.1} parent=5 // pred_fallthru
        _
      %p2164 = scmp.le.s32.totalorder 2, %s30
      // Predicated region
      $region113: #{tpu_custom_call.1} parent=5 // pred_check
        %p2165 = pneg %p2164
      $region114: #{tpu_custom_call.1} parent=5 // pred_check_branch
        %2167 = sbr.rel (%p2165) target = $region116
      $region115: #{tpu_custom_call.1} parent=5 // pred_region
        %s2168 = ssub.s32 %s30, 2
        // Predicated region
        $region117: #{tpu_custom_call.1} parent=115 // pred_check
          %p2169 = pneg %p358
        $region118: #{tpu_custom_call.1} parent=115 // pred_check_branch
          %2171 = sbr.rel (%p2169) target = $region120
        $region119: #{tpu_custom_call.1} parent=115 // pred_region
          %s2172 = sand.u32 %s343, 1
          %s2173 = scalar_lea.sflag [#allocation5], %s2172
          %s2174 = sand.u32 %s343, 1
          %s2175 = smul.addr %s2174, 8
          %s2176 = scalar_lea.vmem [#allocation17], %s2175
          %2177 = dma.done %s2173, 128
        $region120: #{tpu_custom_call.1} parent=115 // pred_fallthru
          _
      $region116: #{tpu_custom_call.1} parent=5 // pred_fallthru
        _
    $region6: #{tpu_custom_call.1} parent=1 // loop_footer
      %s34 = sadd.s32 1, %s30
    $region7: #{tpu_custom_call.1} parent=1 // loop_footer_branch
      %29 = sbr.rel target = $region3
    $region8: #{tpu_custom_call.1} parent=1 // loop_exit
      _
    %2178 = vsyncpa [#allocation4], 1
    %s2179 = scalar_lea.sflag [#allocation4], 1
    %2180 = vsyncpa %s2179, 1
    %2181 = vsyncpa [#allocation7], 1
    %2182 = vsyncpa [#allocation10], 1
    %2183 = vsyncpa [#allocation13], 1
    %2184 = vsyncpa [#allocation16], 1
    %2185 = vsyncpa [#allocation5], 1
    %s2186 = scalar_lea.sflag [#allocation5], 1
    %2187 = vsyncpa %s2186, 1

</llo_original>
